<compile_context>
chip_gen: v7x
topology: tpu7x:2x2x1
jax: 0.10.0
libtpu: 0.0.40
codegen_flags: <defaults>
</compile_context>

<pallas_src>
import jax
import jax.numpy as jnp
from jax.experimental import pallas as pl
from jax.experimental.pallas import tpu as pltpu

IN_DIM = 28 * 28   # 784
H1 = 256
H2 = 64
H2_PAD = 128       # lane-dense padded hidden width for the second/third matmul
OUT = 10
OUT_PAD = 128      # lane-dense padded output width


def _round_up(n, m):
    return ((n + m - 1) // m) * m


def _choose_tb(B, tb_max=512):
    """Pick a batch tile: big enough for MXU/DMA efficiency, small enough that the
    grid has >= 8 steps (>= 3-4 per v7x TensorCore) so the pipeline reaches steady
    state and per-core DMA prologue/epilogue is hidden."""
    bp = _round_up(B, 16)
    if bp <= 128:
        return bp                      # single tile; block == full array dims
    tb = min(tb_max, 512)
    while tb > 128 and -(-bp // tb) < 8:
        tb //= 2
    return tb


def mlp_kernel(x_ref, w1_ref, b1_ref, w2_ref, b2_ref, w3_ref, b3_ref, o_ref):
    # In-kernel f32 -> bf16 cast of the activation stream (free under DMA shadow).
    x = x_ref[...].astype(jnp.bfloat16)                      # (tb, 784)

    # Linear(784 -> 256) + ReLU   (Dropouts are identity in eval mode)
    h1 = jnp.dot(x, w1_ref[...], preferred_element_type=jnp.float32) + b1_ref[...]
    h1 = jnp.maximum(h1, 0.0).astype(jnp.bfloat16)

    # Linear(256 -> 64), zero-padded to 128 lanes, + ReLU. Padded h2 lanes are
    # ReLU(0 + 0) = 0 and the matching W3 rows are zero, so logits are unaffected.
    h2 = jnp.dot(h1, w2_ref[...], preferred_element_type=jnp.float32) + b2_ref[...]
    h2 = jnp.maximum(h2, 0.0).astype(jnp.bfloat16)

    # Linear(64 -> 10), padded to 128 output lanes; padded lanes carry bias -1e30
    # so exp(logit - max) underflows to exactly 0.
    logits = jnp.dot(h2, w3_ref[...], preferred_element_type=jnp.float32) + b3_ref[...]

    # Softmax over the 128 padded lanes (identical to softmax over the real 10).
    m = jnp.max(logits, axis=1, keepdims=True)
    e = jnp.exp(logits - m)
    denom = jnp.sum(e, axis=1, keepdims=True)
    o_ref[...] = (e * pl.reciprocal(denom, approx=True)).astype(o_ref.dtype)


def two_layer_model_forward(x, params, *, tb=None):
    """x: (B, 784) float32. params: dict of (in,out)-transposed f32 weights/biases.

    Returns (B, 10) float32 softmax probabilities (eval-mode forward).
    """
    B = x.shape[0]
    tb = _choose_tb(B) if tb is None else _round_up(min(tb, _round_up(B, 16)), 16)
    bp = _round_up(B, tb)

    # x stays f32 (cast happens in-kernel); only pad the batch remainder if needed.
    if bp != B:
        x = jnp.pad(x, ((0, bp - B), (0, 0)))

    # bf16 weights (f32 accumulation inside the kernel); f32 biases.
    w1 = params["w1"].astype(jnp.bfloat16)
    w2 = jnp.zeros((H1, H2_PAD), jnp.bfloat16).at[:, :H2].set(
        params["w2"].astype(jnp.bfloat16))
    b2 = jnp.zeros((1, H2_PAD), jnp.float32).at[:, :H2].set(
        params["b2"].astype(jnp.float32))
    w3 = jnp.zeros((H2_PAD, OUT_PAD), jnp.bfloat16).at[:H2, :OUT].set(
        params["w3"].astype(jnp.bfloat16))
    b1 = params["b1"].astype(jnp.float32)
    # Padded logit lanes must be driven to -inf-ish so softmax ignores them. The
    # max-subtraction before exp keeps this finite-safe (exp(-1e30 - m) == 0).
    b3 = jnp.full((1, OUT_PAD), -1e30, jnp.float32).at[:, :OUT].set(
        params["b3"].astype(jnp.float32))

    grid = (bp // tb,)

    # Weights/biases are small and grid-invariant -> resident in VMEM, never re-DMA'd.
    full = lambda r, c: pl.BlockSpec((r, c), lambda i: (0, 0))

    weight_bytes = (IN_DIM * H1 + H1 * H2_PAD + H2_PAD * OUT_PAD) * 2
    bias_bytes = (H1 + H2_PAD + OUT_PAD) * 4
    cost = pl.CostEstimate(
        flops=2 * bp * (IN_DIM * H1 + H1 * H2_PAD + H2_PAD * OUT_PAD),
        transcendentals=bp * OUT_PAD,
        bytes_accessed=(bp * IN_DIM * 4      # f32 x read
                        + bp * OUT_PAD * 2   # bf16 output write
                        + weight_bytes + bias_bytes),
    )

    out = pl.pallas_call(
        mlp_kernel,
        out_shape=jax.ShapeDtypeStruct((bp, OUT_PAD), jnp.bfloat16),
        grid_spec=pltpu.PrefetchScalarGridSpec(
            num_scalar_prefetch=0,
            grid=grid,
            in_specs=[
                pl.BlockSpec((tb, IN_DIM), lambda i: (i, 0)),   # f32 x tile
                full(IN_DIM, H1), full(1, H1),
                full(H1, H2_PAD), full(1, H2_PAD),
                full(H2_PAD, OUT_PAD), full(1, OUT_PAD),
            ],
            out_specs=pl.BlockSpec((tb, OUT_PAD), lambda i: (i, 0)),
        ),
        compiler_params=pltpu.CompilerParams(
            dimension_semantics=("parallel",),
        ),
        cost_estimate=cost,
    )(x, w1, b1, w2, b2, w3, b3)

    # Slice away batch/lane padding; cast the tiny (B, 10) result back to f32.
    return out[:B, :OUT].astype(jnp.float32)


def init_params(key):
    """Deterministic init matching nn.Linear shapes. Weights stored transposed
    as (in_features, out_features) for the kernel."""
    ks = jax.random.split(key, 6)

    def linear(kw, kb, fan_in, fan_out):
        bound = 1.0 / jnp.sqrt(fan_in)
        w = jax.random.uniform(kw, (fan_in, fan_out), jnp.float32, -bound, bound)
        b = jax.random.uniform(kb, (1, fan_out), jnp.float32, -bound, bound)
        return w, b

    w1, b1 = linear(ks[0], ks[1], IN_DIM, H1)
    w2, b2 = linear(ks[2], ks[3], H1, H2)
    w3, b3 = linear(ks[4], ks[5], H2, OUT)
    return {"w1": w1, "b1": b1, "w2": w2, "b2": b2, "w3": w3, "b3": b3}


def reference_forward(x, p):
    """Pure-JAX reference using the same bf16 quantization / f32 accumulation as
    the kernel (so the only deltas are accumulation order, the approx reciprocal,
    and the bf16 output cast)."""
    xb = x.astype(jnp.bfloat16)
    w1 = p["w1"].astype(jnp.bfloat16)
    w2 = p["w2"].astype(jnp.bfloat16)
    w3 = p["w3"].astype(jnp.bfloat16)
    h1 = jnp.maximum(jnp.dot(xb, w1, preferred_element_type=jnp.float32) + p["b1"],
                     0.0).astype(jnp.bfloat16)
    h2 = jnp.maximum(jnp.dot(h1, w2, preferred_element_type=jnp.float32) + p["b2"],
                     0.0).astype(jnp.bfloat16)
    logits = jnp.dot(h2, w3, preferred_element_type=jnp.float32) + p["b3"]
    return jax.nn.softmax(logits, axis=1)


# TODO(synk): Dropout layers are implemented as identity (eval-mode); training-mode
# stochastic masking (pltpu.prng_*) is not implemented.

if __name__ == "__main__":
    key = jax.random.PRNGKey(0)
    k_x, k_p = jax.random.split(key)

    # B=1024 keeps input tiny (~3 MB) while giving an 8-step grid at tb=128, so each
    # v7x TensorCore gets 4 pipelined steps (and single-TC chips get 8).
    B = 1024
    x = jax.random.normal(k_x, (B, IN_DIM), dtype=jnp.float32)
    params = init_params(k_p)

    out = two_layer_model_forward(x, params)
    out = jax.block_until_ready(out)

    ref = reference_forward(x, params)
    assert out.shape == (B, OUT)
    max_err = float(jnp.max(jnp.abs(out - ref)))
    # Tolerances account for bf16 matmul inputs, the approx EUP reciprocal, and the
    # bf16 output cast.
    assert jnp.allclose(out, ref, atol=1e-2, rtol=5e-2), (
        f"mismatch vs pure-JAX reference, max abs err {max_err}")
    assert jnp.allclose(jnp.sum(out, axis=1), 1.0, atol=2e-2), (
        "softmax rows must sum to ~1")

    print("KERNEL_OK")
</pallas_src>

<mosaic_0001>
module attributes {stable_mosaic.version = 11 : i64} {
  func.func @mlp_kernel(%arg0: i32, %arg1: memref<128x784xf32, #tpu.memory_space<vmem>>, %arg2: memref<784x256xbf16, #tpu.memory_space<vmem>>, %arg3: memref<1x256xf32, #tpu.memory_space<vmem>>, %arg4: memref<256x128xbf16, #tpu.memory_space<vmem>>, %arg5: memref<1x128xf32, #tpu.memory_space<vmem>>, %arg6: memref<128x128xbf16, #tpu.memory_space<vmem>>, %arg7: memref<1x128xf32, #tpu.memory_space<vmem>>, %arg8: memref<128x128xbf16, #tpu.memory_space<vmem>>) attributes {dimension_semantics = [#tpu.dimension_semantics<parallel>], iteration_bounds = array<i64: 8>, scalar_prefetch = 0 : i64, scratch_operands = 0 : i64, tpu.core_type = #tpu.core_type<tc>, window_params = [{transform_indices = @transform_0, window_bounds = array<i64: 128, 784>}, {pipeline_mode = #tpu.pipeline_mode<synchronous>, transform_indices = @transform_1, window_bounds = array<i64: 784, 256>}, {pipeline_mode = #tpu.pipeline_mode<synchronous>, transform_indices = @transform_2, window_bounds = array<i64: 1, 256>}, {pipeline_mode = #tpu.pipeline_mode<synchronous>, transform_indices = @transform_3, window_bounds = array<i64: 256, 128>}, {pipeline_mode = #tpu.pipeline_mode<synchronous>, transform_indices = @transform_4, window_bounds = array<i64: 1, 128>}, {pipeline_mode = #tpu.pipeline_mode<synchronous>, transform_indices = @transform_5, window_bounds = array<i64: 128, 128>}, {pipeline_mode = #tpu.pipeline_mode<synchronous>, transform_indices = @transform_6, window_bounds = array<i64: 1, 128>}, {transform_indices = @transform_7, window_bounds = array<i64: 128, 128>}]} {
    %c0 = arith.constant 0 : index
    %c0_0 = arith.constant 0 : index
    %0 = vector.load %arg1[%c0, %c0_0] : memref<128x784xf32, #tpu.memory_space<vmem>>, vector<128x784xf32>
    %1 = arith.truncf %0 : vector<128x784xf32> to vector<128x784xbf16>
    %c0_1 = arith.constant 0 : index
    %c0_2 = arith.constant 0 : index
    %2 = vector.load %arg2[%c0_1, %c0_2] : memref<784x256xbf16, #tpu.memory_space<vmem>>, vector<784x256xbf16>
    %cst = arith.constant dense<0.000000e+00> : vector<128x256xf32>
    %3 = tpu.matmul %1, %2, %cst {dimension_numbers = #tpu.dot_dimension_numbers<[1], [0], [0], [1], [0, 0, 1, 1], [], []>} : vector<128x784xbf16>, vector<784x256xbf16>, vector<128x256xf32> -> vector<128x256xf32>
    %c0_3 = arith.constant 0 : index
    %c0_4 = arith.constant 0 : index
    %4 = vector.load %arg3[%c0_3, %c0_4] : memref<1x256xf32, #tpu.memory_space<vmem>>, vector<1x256xf32>
    %5 = vector.broadcast %4 : vector<1x256xf32> to vector<128x256xf32>
    %6 = arith.addf %3, %5 : vector<128x256xf32>
    %cst_5 = arith.constant 0.000000e+00 : f32
    %7 = vector.broadcast %cst_5 : f32 to vector<128x256xf32>
    %8 = arith.maximumf %6, %7 : vector<128x256xf32>
    %9 = arith.truncf %8 : vector<128x256xf32> to vector<128x256xbf16>
    %c0_6 = arith.constant 0 : index
    %c0_7 = arith.constant 0 : index
    %10 = vector.load %arg4[%c0_6, %c0_7] : memref<256x128xbf16, #tpu.memory_space<vmem>>, vector<256x128xbf16>
    %cst_8 = arith.constant dense<0.000000e+00> : vector<128x128xf32>
    %11 = tpu.matmul %9, %10, %cst_8 {dimension_numbers = #tpu.dot_dimension_numbers<[1], [0], [0], [1], [0, 0, 1, 1], [], []>} : vector<128x256xbf16>, vector<256x128xbf16>, vector<128x128xf32> -> vector<128x128xf32>
    %c0_9 = arith.constant 0 : index
    %c0_10 = arith.constant 0 : index
    %12 = vector.load %arg5[%c0_9, %c0_10] : memref<1x128xf32, #tpu.memory_space<vmem>>, vector<1x128xf32>
    %13 = vector.broadcast %12 : vector<1x128xf32> to vector<128x128xf32>
    %14 = arith.addf %11, %13 : vector<128x128xf32>
    %cst_11 = arith.constant 0.000000e+00 : f32
    %15 = vector.broadcast %cst_11 : f32 to vector<128x128xf32>
    %16 = arith.maximumf %14, %15 : vector<128x128xf32>
    %17 = arith.truncf %16 : vector<128x128xf32> to vector<128x128xbf16>
    %c0_12 = arith.constant 0 : index
    %c0_13 = arith.constant 0 : index
    %18 = vector.load %arg6[%c0_12, %c0_13] : memref<128x128xbf16, #tpu.memory_space<vmem>>, vector<128x128xbf16>
    %cst_14 = arith.constant dense<0.000000e+00> : vector<128x128xf32>
    %19 = tpu.matmul %17, %18, %cst_14 {dimension_numbers = #tpu.dot_dimension_numbers<[1], [0], [0], [1], [0, 0, 1, 1], [], []>} : vector<128x128xbf16>, vector<128x128xbf16>, vector<128x128xf32> -> vector<128x128xf32>
    %c0_15 = arith.constant 0 : index
    %c0_16 = arith.constant 0 : index
    %20 = vector.load %arg7[%c0_15, %c0_16] : memref<1x128xf32, #tpu.memory_space<vmem>>, vector<1x128xf32>
    %21 = vector.broadcast %20 : vector<1x128xf32> to vector<128x128xf32>
    %22 = arith.addf %19, %21 : vector<128x128xf32>
    %cst_17 = arith.constant dense<0xFF800000> : vector<128xf32>
    %23 = vector.multi_reduction <maximumf>, %22, %cst_17 [1] : vector<128x128xf32> to vector<128xf32>
    %24 = vector.shape_cast %23 : vector<128xf32> to vector<128x1xf32>
    %25 = vector.broadcast %24 : vector<128x1xf32> to vector<128x128xf32>
    %26 = arith.subf %22, %25 : vector<128x128xf32>
    %27 = math.exp %26 : vector<128x128xf32>
    %cst_18 = arith.constant dense<0.000000e+00> : vector<128xf32>
    %28 = vector.multi_reduction <add>, %27, %cst_18 [1] : vector<128x128xf32> to vector<128xf32>
    %29 = vector.shape_cast %28 : vector<128xf32> to vector<128x1xf32>
    %30 = tpu.reciprocal %29 {approx = true} : vector<128x1xf32> -> vector<128x1xf32>
    %31 = vector.broadcast %30 : vector<128x1xf32> to vector<128x128xf32>
    %32 = arith.mulf %27, %31 : vector<128x128xf32>
    %33 = arith.truncf %32 : vector<128x128xf32> to vector<128x128xbf16>
    %c0_19 = arith.constant 0 : index
    %c0_20 = arith.constant 0 : index
    %34 = vector.load %arg8[%c0_19, %c0_20] : memref<128x128xbf16, #tpu.memory_space<vmem>>, vector<128x128xbf16>
    tpu.vector_store %arg8[%c0_19, %c0_20], %33 {strides = array<i32>} : memref<128x128xbf16, #tpu.memory_space<vmem>>, vector<128x128xbf16>,
    return
  }
  func.func @transform_0(%arg0: i32) -> (i32, i32) {
    %c0_i32 = arith.constant 0 : i32
    %c0_i32_0 = arith.constant 0 : i32
    return %arg0, %c0_i32 : i32, i32
  }
  func.func @transform_1(%arg0: i32) -> (i32, i32) {
    %c0_i32 = arith.constant 0 : i32
    %c0_i32_0 = arith.constant 0 : i32
    %c0_i32_1 = arith.constant 0 : i32
    return %c0_i32, %c0_i32_0 : i32, i32
  }
  func.func @transform_2(%arg0: i32) -> (i32, i32) {
    %c0_i32 = arith.constant 0 : i32
    %c0_i32_0 = arith.constant 0 : i32
    %c0_i32_1 = arith.constant 0 : i32
    return %c0_i32, %c0_i32_0 : i32, i32
  }
  func.func @transform_3(%arg0: i32) -> (i32, i32) {
    %c0_i32 = arith.constant 0 : i32
    %c0_i32_0 = arith.constant 0 : i32
    %c0_i32_1 = arith.constant 0 : i32
    return %c0_i32, %c0_i32_0 : i32, i32
  }
  func.func @transform_4(%arg0: i32) -> (i32, i32) {
    %c0_i32 = arith.constant 0 : i32
    %c0_i32_0 = arith.constant 0 : i32
    %c0_i32_1 = arith.constant 0 : i32
    return %c0_i32, %c0_i32_0 : i32, i32
  }
  func.func @transform_5(%arg0: i32) -> (i32, i32) {
    %c0_i32 = arith.constant 0 : i32
    %c0_i32_0 = arith.constant 0 : i32
    %c0_i32_1 = arith.constant 0 : i32
    return %c0_i32, %c0_i32_0 : i32, i32
  }
  func.func @transform_6(%arg0: i32) -> (i32, i32) {
    %c0_i32 = arith.constant 0 : i32
    %c0_i32_0 = arith.constant 0 : i32
    %c0_i32_1 = arith.constant 0 : i32
    return %c0_i32, %c0_i32_0 : i32, i32
  }
  func.func @transform_7(%arg0: i32) -> (i32, i32) {
    %c0_i32 = arith.constant 0 : i32
    %c0_i32_0 = arith.constant 0 : i32
    return %arg0, %c0_i32 : i32, i32
  }
}

</mosaic_0001>

<llo_original>
// kernel: tpu_custom_call.1
$region0: #{tpu_custom_call.1}
  #allocation0 [shape = 'u32[]', space=smem, size = 0x4, offset = 0x4, fixed_abs, tag = 'smem constant byte address 0x4 - core index']
  #allocation1 [shape = 'u32[144,128]{1,0:T(1,128)}', space=vmem, size = 0x12000, scoped, tag = 'internal scratch']
  %s0 = inlined_call_operand.vmem [shape: f32[1024,784], index: 0, kind: input, shape index: {}]
  %s1 = inlined_call_operand.vmem [shape: bf16[784,256], index: 1, kind: input, shape index: {}]
  %s2 = inlined_call_operand.vmem [shape: f32[1,256], index: 2, kind: input, shape index: {}]
  %s3 = inlined_call_operand.vmem [shape: bf16[256,128], index: 3, kind: input, shape index: {}]
  %s4 = inlined_call_operand.vmem [shape: f32[1,128], index: 4, kind: input, shape index: {}]
  %s5 = inlined_call_operand.vmem [shape: bf16[128,128], index: 5, kind: input, shape index: {}]
  %s6 = inlined_call_operand.vmem [shape: f32[1,128], index: 6, kind: input, shape index: {}]
  %s7 = inlined_call_operand.hbm [shape: bf16[1024,128], index: 7, kind: output, shape index: {}]
  %s8 = sld [smem:[#allocation0]]
  $region61: #{tpu_custom_call.1} parent=0
    _
  %s10 = ssub.s32 1, %s8
  %s11 = scalar_select 0, %s10, %s8
  $region1: #{tpu_custom_call.1} parent=0
    #allocation2 [shape = 'u8[65536]{0}', space=vmem, size = 0x10000, scoped, tag = 'output window, operand 0']
    #allocation3 [shape = 's32[2]{0}', space=sflag, size = 0x8, scoped, tag = 'scoped memory for tpu_custom_call.1']
    %12 = vsyncpa [#allocation3], 0
    %s13 = scalar_lea.sflag [#allocation3], 1
    %14 = vsyncpa %s13, 0
    loop: start=0, step=1, limit=10
    $region2: #{tpu_custom_call.1} parent=1 // loop_pre_header
      _
    $region3: #{tpu_custom_call.1} parent=1 // loop_header
      %s16 = sphi 0, %s20
      %p17 = scmp.ge.s32.totalorder %s16, 10
      %s26 = sphi 0, %s28
      %s29 = sphi 0, %s26
      %s30 = sphi 0, %s29
      %s46 = sphi 0, %s30
      %s50 = sphi 0, %s50
      %s52 = sphi 0, %s50
      %s53 = sphi 0, %s52
      %s67 = sphi 0, %s53
      %s71 = sphi 0, %s71
      %s73 = sphi 0, %s71
      %s74 = sphi 0, %s73
      %s88 = sphi 0, %s74
      %s92 = sphi 0, %s92
      %s94 = sphi 0, %s92
      %s95 = sphi 0, %s94
      %s109 = sphi 0, %s95
      %s113 = sphi 0, %s113
      %s115 = sphi 0, %s113
      %s116 = sphi 0, %s115
      %s130 = sphi 0, %s116
      %s134 = sphi 0, %s134
      %s136 = sphi 0, %s134
      %s137 = sphi 0, %s136
      %s151 = sphi 0, %s137
      %s155 = sphi 0, %s155
      %s157 = sphi 0, %s155
      %s158 = sphi 0, %s157
      %s172 = sphi 0, %s158
      %s178 = sphi 0, %s180
      %s181 = sphi 0, %s178
      %s182 = sphi 0, %s181
      %s198 = sphi 0, %s182
    $region4: #{tpu_custom_call.1} parent=1 // loop_header_branch
      %19 = sbr.rel (%p17) target = $region8
    $region5: #{tpu_custom_call.1} parent=1 // loop_body
      %s21 = ssub.s32 %s16, 1
      %s22 = ssub.s32 %s16, 2
      %s23 = sadd.s32 %s16, 1
      %s24 = ssub.s32 %s16, %s23
      %p25 = scmp.eq.s32.totalorder %s24, 0
      %s27 = sadd.s32 %s26, 1
      %s28 = scalar_select %p25, %s26, %s27
      %p31 = pneg %p25
      %p32 = scmp.eq.s32.totalorder %s16, 7
      %p33 = por %p31, %p32
      %p34 = scmp.ne.s32.totalorder %s26, %s29
      %p35 = scmp.eq.s32.totalorder %s16, 0
      %p36 = por %p34, %p35
      %p37 = scmp.ne.s32.totalorder %s26, %s29
      %p38 = scmp.eq.s32.totalorder %s21, 7
      %p39 = por %p37, %p38
      %p40 = scmp.ne.s32.totalorder %s29, %s30
      %p41 = scmp.eq.s32.totalorder %s21, 0
      %p42 = por %p40, %p41
      %p43 = scmp.ne.s32.totalorder %s29, %s30
      %p44 = scmp.eq.s32.totalorder %s22, 7
      %p45 = por %p43, %p44
      %p47 = scmp.ne.s32.totalorder %s30, %s46
      %p48 = scmp.eq.s32.totalorder %s22, 0
      %p49 = por %p47, %p48
      %s51 = sadd.s32 %s50, 1
      %p54 = scmp.eq.s32.totalorder %s16, 7
      %p55 = scmp.ne.s32.totalorder %s50, %s52
      %p56 = scmp.eq.s32.totalorder %s16, 0
      %p57 = por %p55, %p56
      %p58 = scmp.ne.s32.totalorder %s50, %s52
      %p59 = scmp.eq.s32.totalorder %s21, 7
      %p60 = por %p58, %p59
      %p61 = scmp.ne.s32.totalorder %s52, %s53
      %p62 = scmp.eq.s32.totalorder %s21, 0
      %p63 = por %p61, %p62
      %p64 = scmp.ne.s32.totalorder %s52, %s53
      %p65 = scmp.eq.s32.totalorder %s22, 7
      %p66 = por %p64, %p65
      %p68 = scmp.ne.s32.totalorder %s53, %s67
      %p69 = scmp.eq.s32.totalorder %s22, 0
      %p70 = por %p68, %p69
      %s72 = sadd.s32 %s71, 1
      %p75 = scmp.eq.s32.totalorder %s16, 7
      %p76 = scmp.ne.s32.totalorder %s71, %s73
      %p77 = scmp.eq.s32.totalorder %s16, 0
      %p78 = por %p76, %p77
      %p79 = scmp.ne.s32.totalorder %s71, %s73
      %p80 = scmp.eq.s32.totalorder %s21, 7
      %p81 = por %p79, %p80
      %p82 = scmp.ne.s32.totalorder %s73, %s74
      %p83 = scmp.eq.s32.totalorder %s21, 0
      %p84 = por %p82, %p83
      %p85 = scmp.ne.s32.totalorder %s73, %s74
      %p86 = scmp.eq.s32.totalorder %s22, 7
      %p87 = por %p85, %p86
      %p89 = scmp.ne.s32.totalorder %s74, %s88
      %p90 = scmp.eq.s32.totalorder %s22, 0
      %p91 = por %p89, %p90
      %s93 = sadd.s32 %s92, 1
      %p96 = scmp.eq.s32.totalorder %s16, 7
      %p97 = scmp.ne.s32.totalorder %s92, %s94
      %p98 = scmp.eq.s32.totalorder %s16, 0
      %p99 = por %p97, %p98
      %p100 = scmp.ne.s32.totalorder %s92, %s94
      %p101 = scmp.eq.s32.totalorder %s21, 7
      %p102 = por %p100, %p101
      %p103 = scmp.ne.s32.totalorder %s94, %s95
      %p104 = scmp.eq.s32.totalorder %s21, 0
      %p105 = por %p103, %p104
      %p106 = scmp.ne.s32.totalorder %s94, %s95
      %p107 = scmp.eq.s32.totalorder %s22, 7
      %p108 = por %p106, %p107
      %p110 = scmp.ne.s32.totalorder %s95, %s109
      %p111 = scmp.eq.s32.totalorder %s22, 0
      %p112 = por %p110, %p111
      %s114 = sadd.s32 %s113, 1
      %p117 = scmp.eq.s32.totalorder %s16, 7
      %p118 = scmp.ne.s32.totalorder %s113, %s115
      %p119 = scmp.eq.s32.totalorder %s16, 0
      %p120 = por %p118, %p119
      %p121 = scmp.ne.s32.totalorder %s113, %s115
      %p122 = scmp.eq.s32.totalorder %s21, 7
      %p123 = por %p121, %p122
      %p124 = scmp.ne.s32.totalorder %s115, %s116
      %p125 = scmp.eq.s32.totalorder %s21, 0
      %p126 = por %p124, %p125
      %p127 = scmp.ne.s32.totalorder %s115, %s116
      %p128 = scmp.eq.s32.totalorder %s22, 7
      %p129 = por %p127, %p128
      %p131 = scmp.ne.s32.totalorder %s116, %s130
      %p132 = scmp.eq.s32.totalorder %s22, 0
      %p133 = por %p131, %p132
      %s135 = sadd.s32 %s134, 1
      %p138 = scmp.eq.s32.totalorder %s16, 7
      %p139 = scmp.ne.s32.totalorder %s134, %s136
      %p140 = scmp.eq.s32.totalorder %s16, 0
      %p141 = por %p139, %p140
      %p142 = scmp.ne.s32.totalorder %s134, %s136
      %p143 = scmp.eq.s32.totalorder %s21, 7
      %p144 = por %p142, %p143
      %p145 = scmp.ne.s32.totalorder %s136, %s137
      %p146 = scmp.eq.s32.totalorder %s21, 0
      %p147 = por %p145, %p146
      %p148 = scmp.ne.s32.totalorder %s136, %s137
      %p149 = scmp.eq.s32.totalorder %s22, 7
      %p150 = por %p148, %p149
      %p152 = scmp.ne.s32.totalorder %s137, %s151
      %p153 = scmp.eq.s32.totalorder %s22, 0
      %p154 = por %p152, %p153
      %s156 = sadd.s32 %s155, 1
      %p159 = scmp.eq.s32.totalorder %s16, 7
      %p160 = scmp.ne.s32.totalorder %s155, %s157
      %p161 = scmp.eq.s32.totalorder %s16, 0
      %p162 = por %p160, %p161
      %p163 = scmp.ne.s32.totalorder %s155, %s157
      %p164 = scmp.eq.s32.totalorder %s21, 7
      %p165 = por %p163, %p164
      %p166 = scmp.ne.s32.totalorder %s157, %s158
      %p167 = scmp.eq.s32.totalorder %s21, 0
      %p168 = por %p166, %p167
      %p169 = scmp.ne.s32.totalorder %s157, %s158
      %p170 = scmp.eq.s32.totalorder %s22, 7
      %p171 = por %p169, %p170
      %p173 = scmp.ne.s32.totalorder %s158, %s172
      %p174 = scmp.eq.s32.totalorder %s22, 0
      %p175 = por %p173, %p174
      %s176 = ssub.s32 %s16, %s23
      %p177 = scmp.eq.s32.totalorder %s176, 0
      %s179 = sadd.s32 %s178, 1
      %s180 = scalar_select %p177, %s178, %s179
      %p183 = pneg %p177
      %p184 = scmp.eq.s32.totalorder %s16, 7
      %p185 = por %p183, %p184
      %p186 = scmp.ne.s32.totalorder %s178, %s181
      %p187 = scmp.eq.s32.totalorder %s16, 0
      %p188 = por %p186, %p187
      %p189 = scmp.ne.s32.totalorder %s178, %s181
      %p190 = scmp.eq.s32.totalorder %s21, 7
      %p191 = por %p189, %p190
      %p192 = scmp.ne.s32.totalorder %s181, %s182
      %p193 = scmp.eq.s32.totalorder %s21, 0
      %p194 = por %p192, %p193
      %p195 = scmp.ne.s32.totalorder %s181, %s182
      %p196 = scmp.eq.s32.totalorder %s22, 7
      %p197 = por %p195, %p196
      %p199 = scmp.ne.s32.totalorder %s182, %s198
      %p200 = scmp.eq.s32.totalorder %s22, 0
      %p201 = por %p199, %p200
      %p202 = scmp.le.s32.totalorder 1, %s16
      %p203 = scmp.lt.s32.totalorder %s16, 9
      %p204 = pnand %p202, %p203
      %p205 = pneg %p204
      // Predicated region
      $region9: #{tpu_custom_call.1} parent=5 // pred_check
        _
      $region10: #{tpu_custom_call.1} parent=5 // pred_check_branch
        %207 = sbr.rel (%p204) target = $region12
      $region11: #{tpu_custom_call.1} parent=5 // pred_region
        %s208 = ssub.s32 %s16, 1
        // Predicated region
        $region13: #{tpu_custom_call.1} parent=11 // pred_check
          %p209 = pneg %p63
        $region14: #{tpu_custom_call.1} parent=11 // pred_check_branch
          %211 = sbr.rel (%p209) target = $region16
        $region15: #{tpu_custom_call.1} parent=11 // pred_region
          _
        $region16: #{tpu_custom_call.1} parent=11 // pred_fallthru
          _
        // Predicated region
        $region17: #{tpu_custom_call.1} parent=11 // pred_check
          %p212 = pneg %p84
        $region18: #{tpu_custom_call.1} parent=11 // pred_check_branch
          %214 = sbr.rel (%p212) target = $region20
        $region19: #{tpu_custom_call.1} parent=11 // pred_region
          _
        $region20: #{tpu_custom_call.1} parent=11 // pred_fallthru
          _
        // Predicated region
        $region21: #{tpu_custom_call.1} parent=11 // pred_check
          %p215 = pneg %p105
        $region22: #{tpu_custom_call.1} parent=11 // pred_check_branch
          %217 = sbr.rel (%p215) target = $region24
        $region23: #{tpu_custom_call.1} parent=11 // pred_region
          _
        $region24: #{tpu_custom_call.1} parent=11 // pred_fallthru
          _
        // Predicated region
        $region25: #{tpu_custom_call.1} parent=11 // pred_check
          %p218 = pneg %p126
        $region26: #{tpu_custom_call.1} parent=11 // pred_check_branch
          %220 = sbr.rel (%p218) target = $region28
        $region27: #{tpu_custom_call.1} parent=11 // pred_region
          _
        $region28: #{tpu_custom_call.1} parent=11 // pred_fallthru
          _
        // Predicated region
        $region29: #{tpu_custom_call.1} parent=11 // pred_check
          %p221 = pneg %p147
        $region30: #{tpu_custom_call.1} parent=11 // pred_check_branch
          %223 = sbr.rel (%p221) target = $region32
        $region31: #{tpu_custom_call.1} parent=11 // pred_region
          _
        $region32: #{tpu_custom_call.1} parent=11 // pred_fallthru
          _
        // Predicated region
        $region33: #{tpu_custom_call.1} parent=11 // pred_check
          %p224 = pneg %p168
        $region34: #{tpu_custom_call.1} parent=11 // pred_check_branch
          %226 = sbr.rel (%p224) target = $region36
        $region35: #{tpu_custom_call.1} parent=11 // pred_region
          _
        $region36: #{tpu_custom_call.1} parent=11 // pred_fallthru
          _
      $region12: #{tpu_custom_call.1} parent=5 // pred_fallthru
        _
      %p227 = scmp.lt.s32.totalorder %s16, 8
      // Predicated region
      $region37: #{tpu_custom_call.1} parent=5 // pred_check
        %p228 = pneg %p227
      $region38: #{tpu_custom_call.1} parent=5 // pred_check_branch
        %230 = sbr.rel (%p228) target = $region40
      $region39: #{tpu_custom_call.1} parent=5 // pred_region
        // Predicated region
        $region41: #{tpu_custom_call.1} parent=39 // pred_check
          %p231 = pneg %p36
        $region42: #{tpu_custom_call.1} parent=39 // pred_check_branch
          %233 = sbr.rel (%p231) target = $region44
        $region43: #{tpu_custom_call.1} parent=39 // pred_region
          %s234 = smul.u32 16, %s16
          %p235 = scmp.lt.s32.totalorder %s234, 127
          %s236 = scalar_select %p235, %s234, 127
          %s237 = smul.addr %s236, 7
          %s238 = smul.addr %s237, 8
          %s239 = scalar_lea.vmem %s0, %s238
          %s240 = smul.u32 16, %s16
        $region44: #{tpu_custom_call.1} parent=39 // pred_fallthru
          _
      $region40: #{tpu_custom_call.1} parent=5 // pred_fallthru
        _
      %p241 = scmp.le.s32.totalorder 1, %s16
      %p242 = scmp.lt.s32.totalorder %s16, 9
      %p243 = pnand %p241, %p242
      %p244 = pneg %p243
      // Predicated region
      $region45: #{tpu_custom_call.1} parent=5 // pred_check
        _
      $region46: #{tpu_custom_call.1} parent=5 // pred_check_branch
        %246 = sbr.rel (%p243) target = $region48
      $region47: #{tpu_custom_call.1} parent=5 // pred_region
        %s247 = ssub.s32 %s16, 1
        %s248 = smul.u32 16, %s21
        %p249 = scmp.lt.s32.totalorder %s248, 127
        %s250 = scalar_select %p249, %s248, 127
        %s251 = smul.addr %s250, 7
        %s252 = smul.addr %s251, 8
        %s253 = scalar_lea.vmem %s0, %s252
        %p254 = pneg %p42
        %p255 = pneg %p39
        %p256 = pneg %p63
        %p257 = pneg %p60
        %p258 = pneg %p84
        %p259 = pneg %p81
        %p260 = pneg %p105
        %p261 = pneg %p102
        %p262 = pneg %p126
        %p263 = pneg %p123
        %p264 = pneg %p147
        %p265 = pneg %p144
        %p266 = pneg %p168
        %p267 = pneg %p165
        %p268 = pneg %p194
        %p269 = pneg %p191
        %s270 = sand.u32 %s181, 1
        %s271 = scalar_lea.sflag [#allocation3], %s270
        %s272 = sand.u32 %s181, 1
        %s273 = smul.addr %s272, 64
        %s274 = scalar_lea.vmem [#allocation2], %s273
        %s275 = smul.u32 16, %s21
        %p276 = scmp.lt.s32.totalorder %s275, 127
        %s277 = scalar_select %p276, %s275, 127
        %s278 = smul.addr %s277, 7
        %s279 = smul.addr %s278, 8
        %s280 = scalar_lea.vmem %s0, %s279
        %s281 = smul.u32 16, %s21
        %s282 = smul.u32 16, %s21
        %v284 = vld [vmem:[%s280] sm:$0xff]
        %v285 = vld [vmem:[%s280 + $0x8] sm:$0xff]
        %v286 = vld [vmem:[%s280 + $0x10] sm:$0xff]
        %v287 = vld [vmem:[%s280 + $0x18] sm:$0xff]
        %v288 = vld [vmem:[%s280 + $0x20] sm:$0xff]
        %v289 = vld [vmem:[%s280 + $0x28] sm:$0xff]
        %v290 = vld [vmem:[%s280 + $0x30] sm:$0xff]
        %v291 = vld [vmem:[%s280 + $0x38] sm:$0xff]
        %v292 = vld [vmem:[%s280 + $0x40] sm:$0xff]
        %v293 = vld [vmem:[%s280 + $0x48] sm:$0xff]
        %v294 = vld [vmem:[%s280 + $0x50] sm:$0xff]
        %v295 = vld [vmem:[%s280 + $0x58] sm:$0xff]
        %v296 = vld [vmem:[%s280 + $0x60] sm:$0xff]
        %v297 = vld [vmem:[%s280 + $0x68] sm:$0xff]
        %v298 = vld [vmem:[%s280 + $0x70] sm:$0xff]
        %v299 = vld [vmem:[%s280 + $0x78] sm:$0xff]
        %v300 = vld [vmem:[%s280 + $0x80] sm:$0xff]
        %v301 = vld [vmem:[%s280 + $0x88] sm:$0xff]
        %v302 = vld [vmem:[%s280 + $0x90] sm:$0xff]
        %v303 = vld [vmem:[%s280 + $0x98] sm:$0xff]
        %v304 = vld [vmem:[%s280 + $0xa0] sm:$0xff]
        %v305 = vld [vmem:[%s280 + $0xa8] sm:$0xff]
        %v306 = vld [vmem:[%s280 + $0xb0] sm:$0xff]
        %v307 = vld [vmem:[%s280 + $0xb8] sm:$0xff]
        %v308 = vld [vmem:[%s280 + $0xc0] sm:$0xff]
        %v309 = vld [vmem:[%s280 + $0xc8] sm:$0xff]
        %v310 = vld [vmem:[%s280 + $0xd0] sm:$0xff]
        %v311 = vld [vmem:[%s280 + $0xd8] sm:$0xff]
        %v312 = vld [vmem:[%s280 + $0xe0] sm:$0xff]
        %v313 = vld [vmem:[%s280 + $0xe8] sm:$0xff]
        %v314 = vld [vmem:[%s280 + $0xf0] sm:$0xff]
        %v315 = vld [vmem:[%s280 + $0xf8] sm:$0xff]
        %v316 = vld [vmem:[%s280 + $0x100] sm:$0xff]
        %v317 = vld [vmem:[%s280 + $0x108] sm:$0xff]
        %v318 = vld [vmem:[%s280 + $0x110] sm:$0xff]
        %v319 = vld [vmem:[%s280 + $0x118] sm:$0xff]
        %v320 = vld [vmem:[%s280 + $0x120] sm:$0xff]
        %v321 = vld [vmem:[%s280 + $0x128] sm:$0xff]
        %v322 = vld [vmem:[%s280 + $0x130] sm:$0xff]
        %v323 = vld [vmem:[%s280 + $0x138] sm:$0xff]
        %v324 = vld [vmem:[%s280 + $0x140] sm:$0xff]
        %v325 = vld [vmem:[%s280 + $0x148] sm:$0xff]
        %v326 = vld [vmem:[%s280 + $0x150] sm:$0xff]
        %v327 = vld [vmem:[%s280 + $0x158] sm:$0xff]
        %v328 = vld [vmem:[%s280 + $0x160] sm:$0xff]
        %v329 = vld [vmem:[%s280 + $0x168] sm:$0xff]
        %v330 = vld [vmem:[%s280 + $0x170] sm:$0xff]
        %v331 = vld [vmem:[%s280 + $0x178] sm:$0xff]
        %v332 = vld [vmem:[%s280 + $0x180] sm:$0xff]
        %v333 = vld [vmem:[%s280 + $0x188] sm:$0xff]
        %v334 = vld [vmem:[%s280 + $0x190] sm:$0xff]
        %v335 = vld [vmem:[%s280 + $0x198] sm:$0xff]
        %v336 = vld [vmem:[%s280 + $0x1a0] sm:$0xff]
        %v337 = vld [vmem:[%s280 + $0x1a8] sm:$0xff]
        %v338 = vld [vmem:[%s280 + $0x1b0] sm:$0xff]
        %v339 = vld [vmem:[%s280 + $0x1b8] sm:$0xff]
        %v340 = vld [vmem:[%s280 + $0x1c0] sm:$0xff]
        %v341 = vld [vmem:[%s280 + $0x1c8] sm:$0xff]
        %v342 = vld [vmem:[%s280 + $0x1d0] sm:$0xff]
        %v343 = vld [vmem:[%s280 + $0x1d8] sm:$0xff]
        %v344 = vld [vmem:[%s280 + $0x1e0] sm:$0xff]
        %v345 = vld [vmem:[%s280 + $0x1e8] sm:$0xff]
        %v346 = vld [vmem:[%s280 + $0x1f0] sm:$0xff]
        %v347 = vld [vmem:[%s280 + $0x1f8] sm:$0xff]
        %v348 = vld [vmem:[%s280 + $0x200] sm:$0xff]
        %v349 = vld [vmem:[%s280 + $0x208] sm:$0xff]
        %v350 = vld [vmem:[%s280 + $0x210] sm:$0xff]
        %v351 = vld [vmem:[%s280 + $0x218] sm:$0xff]
        %v352 = vld [vmem:[%s280 + $0x220] sm:$0xff]
        %v353 = vld [vmem:[%s280 + $0x228] sm:$0xff]
        %v354 = vld [vmem:[%s280 + $0x230] sm:$0xff]
        %v355 = vld [vmem:[%s280 + $0x238] sm:$0xff]
        %v356 = vld [vmem:[%s280 + $0x240] sm:$0xff]
        %v357 = vld [vmem:[%s280 + $0x248] sm:$0xff]
        %v358 = vld [vmem:[%s280 + $0x250] sm:$0xff]
        %v359 = vld [vmem:[%s280 + $0x258] sm:$0xff]
        %v360 = vld [vmem:[%s280 + $0x260] sm:$0xff]
        %v361 = vld [vmem:[%s280 + $0x268] sm:$0xff]
        %v362 = vld [vmem:[%s280 + $0x270] sm:$0xff]
        %v363 = vld [vmem:[%s280 + $0x278] sm:$0xff]
        %v364 = vld [vmem:[%s280 + $0x280] sm:$0xff]
        %v365 = vld [vmem:[%s280 + $0x288] sm:$0xff]
        %v366 = vld [vmem:[%s280 + $0x290] sm:$0xff]
        %v367 = vld [vmem:[%s280 + $0x298] sm:$0xff]
        %v368 = vld [vmem:[%s280 + $0x2a0] sm:$0xff]
        %v369 = vld [vmem:[%s280 + $0x2a8] sm:$0xff]
        %v370 = vld [vmem:[%s280 + $0x2b0] sm:$0xff]
        %v371 = vld [vmem:[%s280 + $0x2b8] sm:$0xff]
        %v372 = vld [vmem:[%s280 + $0x2c0] sm:$0xff]
        %v373 = vld [vmem:[%s280 + $0x2c8] sm:$0xff]
        %v374 = vld [vmem:[%s280 + $0x2d0] sm:$0xff]
        %v375 = vld [vmem:[%s280 + $0x2d8] sm:$0xff]
        %v376 = vld [vmem:[%s280 + $0x2e0] sm:$0xff]
        %v377 = vld [vmem:[%s280 + $0x2e8] sm:$0xff]
        %v378 = vld [vmem:[%s280 + $0x2f0] sm:$0xff]
        %v379 = vld [vmem:[%s280 + $0x2f8] sm:$0xff]
        %v380 = vld [vmem:[%s280 + $0x300] sm:$0xff]
        %v381 = vld [vmem:[%s280 + $0x308] sm:$0xff]
        %v382 = vld [vmem:[%s280 + $0x310] sm:$0xff]
        %v383 = vld [vmem:[%s280 + $0x318] sm:$0xff]
        %v384 = vld [vmem:[%s280 + $0x320] sm:$0xff]
        %v385 = vld [vmem:[%s280 + $0x328] sm:$0xff]
        %v386 = vld [vmem:[%s280 + $0x330] sm:$0xff]
        %v387 = vld [vmem:[%s280 + $0x338] sm:$0xff]
        %v388 = vld [vmem:[%s280 + $0x340] sm:$0xff]
        %v389 = vld [vmem:[%s280 + $0x348] sm:$0xff]
        %v390 = vld [vmem:[%s280 + $0x350] sm:$0xff]
        %v391 = vld [vmem:[%s280 + $0x358] sm:$0xff]
        %v392 = vld [vmem:[%s280 + $0x360] sm:$0xff]
        %v393 = vld [vmem:[%s280 + $0x368] sm:$0xff]
        %v394 = vld [vmem:[%s280 + $0x370] sm:$0xff]
        %v395 = vld [vmem:[%s280 + $0x378] sm:$0xff]
        %v396 = vpack.c.bf16 %v291, %v284
        %v397 = vpack.c.bf16 %v292, %v285
        %v398 = vpack.c.bf16 %v293, %v286
        %v399 = vpack.c.bf16 %v294, %v287
        %v400 = vpack.c.bf16 %v295, %v288
        %v401 = vpack.c.bf16 %v296, %v289
        %v402 = vpack.c.bf16 %v297, %v290
        %v403 = vpack.c.bf16 %v305, %v298
        %v404 = vpack.c.bf16 %v306, %v299
        %v405 = vpack.c.bf16 %v307, %v300
        %v406 = vpack.c.bf16 %v308, %v301
        %v407 = vpack.c.bf16 %v309, %v302
        %v408 = vpack.c.bf16 %v310, %v303
        %v409 = vpack.c.bf16 %v311, %v304
        %v410 = vpack.c.bf16 %v319, %v312
        %v411 = vpack.c.bf16 %v320, %v313
        %v412 = vpack.c.bf16 %v321, %v314
        %v413 = vpack.c.bf16 %v322, %v315
        %v414 = vpack.c.bf16 %v323, %v316
        %v415 = vpack.c.bf16 %v324, %v317
        %v416 = vpack.c.bf16 %v325, %v318
        %v417 = vpack.c.bf16 %v333, %v326
        %v418 = vpack.c.bf16 %v334, %v327
        %v419 = vpack.c.bf16 %v335, %v328
        %v420 = vpack.c.bf16 %v336, %v329
        %v421 = vpack.c.bf16 %v337, %v330
        %v422 = vpack.c.bf16 %v338, %v331
        %v423 = vpack.c.bf16 %v339, %v332
        %v424 = vpack.c.bf16 %v347, %v340
        %v425 = vpack.c.bf16 %v348, %v341
        %v426 = vpack.c.bf16 %v349, %v342
        %v427 = vpack.c.bf16 %v350, %v343
        %v428 = vpack.c.bf16 %v351, %v344
        %v429 = vpack.c.bf16 %v352, %v345
        %v430 = vpack.c.bf16 %v353, %v346
        %v431 = vpack.c.bf16 %v361, %v354
        %v432 = vpack.c.bf16 %v362, %v355
        %v433 = vpack.c.bf16 %v363, %v356
        %v434 = vpack.c.bf16 %v364, %v357
        %v435 = vpack.c.bf16 %v365, %v358
        %v436 = vpack.c.bf16 %v366, %v359
        %v437 = vpack.c.bf16 %v367, %v360
        %v438 = vpack.c.bf16 %v375, %v368
        %v439 = vpack.c.bf16 %v376, %v369
        %v440 = vpack.c.bf16 %v377, %v370
        %v441 = vpack.c.bf16 %v378, %v371
        %v442 = vpack.c.bf16 %v379, %v372
        %v443 = vpack.c.bf16 %v380, %v373
        %v444 = vpack.c.bf16 %v381, %v374
        %v445 = vpack.c.bf16 %v389, %v382
        %v446 = vpack.c.bf16 %v390, %v383
        %v447 = vpack.c.bf16 %v391, %v384
        %v448 = vpack.c.bf16 %v392, %v385
        %v449 = vpack.c.bf16 %v393, %v386
        %v450 = vpack.c.bf16 %v394, %v387
        %v451 = vpack.c.bf16 %v395, %v388
        %v452 = vld [vmem:[%s1] sm:$0xff]
        %v453 = vld [vmem:[%s1 + $0x8] sm:$0xff]
        %v454 = vld [vmem:[%s1 + $0x10] sm:$0xff]
        %v455 = vld [vmem:[%s1 + $0x18] sm:$0xff]
        %v456 = vld [vmem:[%s1 + $0x20] sm:$0xff]
        %v457 = vld [vmem:[%s1 + $0x28] sm:$0xff]
        %v458 = vld [vmem:[%s1 + $0x30] sm:$0xff]
        %v459 = vld [vmem:[%s1 + $0x38] sm:$0xff]
        %v460 = vld [vmem:[%s1 + $0x40] sm:$0xff]
        %v461 = vld [vmem:[%s1 + $0x48] sm:$0xff]
        %v462 = vld [vmem:[%s1 + $0x50] sm:$0xff]
        %v463 = vld [vmem:[%s1 + $0x58] sm:$0xff]
        %v464 = vld [vmem:[%s1 + $0x60] sm:$0xff]
        %v465 = vld [vmem:[%s1 + $0x68] sm:$0xff]
        %v466 = vld [vmem:[%s1 + $0x70] sm:$0xff]
        %v467 = vld [vmem:[%s1 + $0x78] sm:$0xff]
        %v468 = vld [vmem:[%s1 + $0x80] sm:$0xff]
        %v469 = vld [vmem:[%s1 + $0x88] sm:$0xff]
        %v470 = vld [vmem:[%s1 + $0x90] sm:$0xff]
        %v471 = vld [vmem:[%s1 + $0x98] sm:$0xff]
        %v472 = vld [vmem:[%s1 + $0xa0] sm:$0xff]
        %v473 = vld [vmem:[%s1 + $0xa8] sm:$0xff]
        %v474 = vld [vmem:[%s1 + $0xb0] sm:$0xff]
        %v475 = vld [vmem:[%s1 + $0xb8] sm:$0xff]
        %v476 = vld [vmem:[%s1 + $0xc0] sm:$0xff]
        %v477 = vld [vmem:[%s1 + $0xc8] sm:$0xff]
        %v478 = vld [vmem:[%s1 + $0xd0] sm:$0xff]
        %v479 = vld [vmem:[%s1 + $0xd8] sm:$0xff]
        %v480 = vld [vmem:[%s1 + $0xe0] sm:$0xff]
        %v481 = vld [vmem:[%s1 + $0xe8] sm:$0xff]
        %v482 = vld [vmem:[%s1 + $0xf0] sm:$0xff]
        %v483 = vld [vmem:[%s1 + $0xf8] sm:$0xff]
        %v484 = vld [vmem:[%s1 + $0x100] sm:$0xff]
        %v485 = vld [vmem:[%s1 + $0x108] sm:$0xff]
        %v486 = vld [vmem:[%s1 + $0x110] sm:$0xff]
        %v487 = vld [vmem:[%s1 + $0x118] sm:$0xff]
        %v488 = vld [vmem:[%s1 + $0x120] sm:$0xff]
        %v489 = vld [vmem:[%s1 + $0x128] sm:$0xff]
        %v490 = vld [vmem:[%s1 + $0x130] sm:$0xff]
        %v491 = vld [vmem:[%s1 + $0x138] sm:$0xff]
        %v492 = vld [vmem:[%s1 + $0x140] sm:$0xff]
        %v493 = vld [vmem:[%s1 + $0x148] sm:$0xff]
        %v494 = vld [vmem:[%s1 + $0x150] sm:$0xff]
        %v495 = vld [vmem:[%s1 + $0x158] sm:$0xff]
        %v496 = vld [vmem:[%s1 + $0x160] sm:$0xff]
        %v497 = vld [vmem:[%s1 + $0x168] sm:$0xff]
        %v498 = vld [vmem:[%s1 + $0x170] sm:$0xff]
        %v499 = vld [vmem:[%s1 + $0x178] sm:$0xff]
        %v500 = vld [vmem:[%s1 + $0x180] sm:$0xff]
        %v501 = vld [vmem:[%s1 + $0x188] sm:$0xff]
        %v502 = vld [vmem:[%s1 + $0x190] sm:$0xff]
        %v503 = vld [vmem:[%s1 + $0x198] sm:$0xff]
        %v504 = vld [vmem:[%s1 + $0x1a0] sm:$0xff]
        %v505 = vld [vmem:[%s1 + $0x1a8] sm:$0xff]
        %v506 = vld [vmem:[%s1 + $0x1b0] sm:$0xff]
        %v507 = vld [vmem:[%s1 + $0x1b8] sm:$0xff]
        %v508 = vld [vmem:[%s1 + $0x1c0] sm:$0xff]
        %v509 = vld [vmem:[%s1 + $0x1c8] sm:$0xff]
        %v510 = vld [vmem:[%s1 + $0x1d0] sm:$0xff]
        %v511 = vld [vmem:[%s1 + $0x1d8] sm:$0xff]
        %v512 = vld [vmem:[%s1 + $0x1e0] sm:$0xff]
        %v513 = vld [vmem:[%s1 + $0x1e8] sm:$0xff]
        %v514 = vld [vmem:[%s1 + $0x1f0] sm:$0xff]
        %v515 = vld [vmem:[%s1 + $0x1f8] sm:$0xff]
        %v516 = vld [vmem:[%s1 + $0x200] sm:$0xff]
        %v517 = vld [vmem:[%s1 + $0x208] sm:$0xff]
        %v518 = vld [vmem:[%s1 + $0x210] sm:$0xff]
        %v519 = vld [vmem:[%s1 + $0x218] sm:$0xff]
        %v520 = vld [vmem:[%s1 + $0x220] sm:$0xff]
        %v521 = vld [vmem:[%s1 + $0x228] sm:$0xff]
        %v522 = vld [vmem:[%s1 + $0x230] sm:$0xff]
        %v523 = vld [vmem:[%s1 + $0x238] sm:$0xff]
        %v524 = vld [vmem:[%s1 + $0x240] sm:$0xff]
        %v525 = vld [vmem:[%s1 + $0x248] sm:$0xff]
        %v526 = vld [vmem:[%s1 + $0x250] sm:$0xff]
        %v527 = vld [vmem:[%s1 + $0x258] sm:$0xff]
        %v528 = vld [vmem:[%s1 + $0x260] sm:$0xff]
        %v529 = vld [vmem:[%s1 + $0x268] sm:$0xff]
        %v530 = vld [vmem:[%s1 + $0x270] sm:$0xff]
        %v531 = vld [vmem:[%s1 + $0x278] sm:$0xff]
        %v532 = vld [vmem:[%s1 + $0x280] sm:$0xff]
        %v533 = vld [vmem:[%s1 + $0x288] sm:$0xff]
        %v534 = vld [vmem:[%s1 + $0x290] sm:$0xff]
        %v535 = vld [vmem:[%s1 + $0x298] sm:$0xff]
        %v536 = vld [vmem:[%s1 + $0x2a0] sm:$0xff]
        %v537 = vld [vmem:[%s1 + $0x2a8] sm:$0xff]
        %v538 = vld [vmem:[%s1 + $0x2b0] sm:$0xff]
        %v539 = vld [vmem:[%s1 + $0x2b8] sm:$0xff]
        %v540 = vld [vmem:[%s1 + $0x2c0] sm:$0xff]
        %v541 = vld [vmem:[%s1 + $0x2c8] sm:$0xff]
        %v542 = vld [vmem:[%s1 + $0x2d0] sm:$0xff]
        %v543 = vld [vmem:[%s1 + $0x2d8] sm:$0xff]
        %v544 = vld [vmem:[%s1 + $0x2e0] sm:$0xff]
        %v545 = vld [vmem:[%s1 + $0x2e8] sm:$0xff]
        %v546 = vld [vmem:[%s1 + $0x2f0] sm:$0xff]
        %v547 = vld [vmem:[%s1 + $0x2f8] sm:$0xff]
        %v548 = vld [vmem:[%s1 + $0x300] sm:$0xff]
        %v549 = vld [vmem:[%s1 + $0x308] sm:$0xff]
        %v550 = vld [vmem:[%s2] sm:$0x3]
        %v552 = vlaneseq
        %v553 = vshrl.u32 %v552, 7
        %v554 = vsub.s32 0, %v553
        %v555 = vrot.slane %v550, %v554
        %v556 = vlaneseq
        %v557 = vshrl.u32 %v556, 7
        %v558 = vsub.s32 1, %v557
        %v559 = vrot.slane %v550, %v558
        %v660 = vunpack.c.l.b16 %v452
        %v661 = vunpack.c.h.b16 %v452
        %v662 = vunpack.c.l.b16 %v453
        %v663 = vunpack.c.h.b16 %v453
        %v664 = vunpack.c.l.b16 %v454
        %v665 = vunpack.c.h.b16 %v454
        %v666 = vunpack.c.l.b16 %v455
        %v667 = vunpack.c.h.b16 %v455
        %v668 = vunpack.c.l.b16 %v456
        %v669 = vunpack.c.h.b16 %v456
        %v670 = vunpack.c.l.b16 %v457
        %v671 = vunpack.c.h.b16 %v457
        %v672 = vunpack.c.l.b16 %v458
        %v673 = vunpack.c.h.b16 %v458
        %v674 = vunpack.c.l.b16 %v459
        %v675 = vunpack.c.h.b16 %v459
        %v676 = vunpack.c.l.b16 %v460
        %v677 = vunpack.c.h.b16 %v460
        %v678 = vunpack.c.l.b16 %v461
        %v679 = vunpack.c.h.b16 %v461
        %v680 = vunpack.c.l.b16 %v462
        %v681 = vunpack.c.h.b16 %v462
        %v682 = vunpack.c.l.b16 %v463
        %v683 = vunpack.c.h.b16 %v463
        %v684 = vunpack.c.l.b16 %v464
        %v685 = vunpack.c.h.b16 %v464
        %v686 = vunpack.c.l.b16 %v465
        %v687 = vunpack.c.h.b16 %v465
        %v688 = vunpack.c.l.b16 %v466
        %v689 = vunpack.c.h.b16 %v466
        %v690 = vunpack.c.l.b16 %v467
        %v691 = vunpack.c.h.b16 %v467
        %v692 = vunpack.c.l.b16 %v468
        %v693 = vunpack.c.h.b16 %v468
        %v694 = vunpack.c.l.b16 %v469
        %v695 = vunpack.c.h.b16 %v469
        %v696 = vunpack.c.l.b16 %v470
        %v697 = vunpack.c.h.b16 %v470
        %v698 = vunpack.c.l.b16 %v471
        %v699 = vunpack.c.h.b16 %v471
        %v700 = vunpack.c.l.b16 %v472
        %v701 = vunpack.c.h.b16 %v472
        %v702 = vunpack.c.l.b16 %v473
        %v703 = vunpack.c.h.b16 %v473
        %v704 = vunpack.c.l.b16 %v474
        %v705 = vunpack.c.h.b16 %v474
        %v706 = vunpack.c.l.b16 %v475
        %v707 = vunpack.c.h.b16 %v475
        %v708 = vunpack.c.l.b16 %v476
        %v709 = vunpack.c.h.b16 %v476
        %v710 = vunpack.c.l.b16 %v477
        %v711 = vunpack.c.h.b16 %v477
        %v712 = vunpack.c.l.b16 %v478
        %v713 = vunpack.c.h.b16 %v478
        %v714 = vunpack.c.l.b16 %v479
        %v715 = vunpack.c.h.b16 %v479
        %v716 = vunpack.c.l.b16 %v480
        %v717 = vunpack.c.h.b16 %v480
        %v718 = vunpack.c.l.b16 %v481
        %v719 = vunpack.c.h.b16 %v481
        %v720 = vunpack.c.l.b16 %v482
        %v721 = vunpack.c.h.b16 %v482
        %v722 = vunpack.c.l.b16 %v483
        %v723 = vunpack.c.h.b16 %v483
        %v724 = vunpack.c.l.b16 %v484
        %v725 = vunpack.c.h.b16 %v484
        %v726 = vunpack.c.l.b16 %v485
        %v727 = vunpack.c.h.b16 %v485
        %v728 = vunpack.c.l.b16 %v486
        %v729 = vunpack.c.h.b16 %v486
        %v730 = vunpack.c.l.b16 %v487
        %v731 = vunpack.c.h.b16 %v487
        %v732 = vunpack.c.l.b16 %v488
        %v733 = vunpack.c.h.b16 %v488
        %v734 = vunpack.c.l.b16 %v489
        %v735 = vunpack.c.h.b16 %v489
        %v736 = vunpack.c.l.b16 %v490
        %v737 = vunpack.c.h.b16 %v490
        %v738 = vunpack.c.l.b16 %v491
        %v739 = vunpack.c.h.b16 %v491
        %v740 = vunpack.c.l.b16 %v492
        %v741 = vunpack.c.h.b16 %v492
        %v742 = vunpack.c.l.b16 %v493
        %v743 = vunpack.c.h.b16 %v493
        %v744 = vunpack.c.l.b16 %v494
        %v745 = vunpack.c.h.b16 %v494
        %v746 = vunpack.c.l.b16 %v495
        %v747 = vunpack.c.h.b16 %v495
        %v748 = vunpack.c.l.b16 %v496
        %v749 = vunpack.c.h.b16 %v496
        %v750 = vunpack.c.l.b16 %v497
        %v751 = vunpack.c.h.b16 %v497
        %v752 = vunpack.c.l.b16 %v498
        %v753 = vunpack.c.h.b16 %v498
        %v754 = vunpack.c.l.b16 %v499
        %v755 = vunpack.c.h.b16 %v499
        %v756 = vunpack.c.l.b16 %v500
        %v757 = vunpack.c.h.b16 %v500
        %v758 = vunpack.c.l.b16 %v501
        %v759 = vunpack.c.h.b16 %v501
        %v760 = vunpack.c.l.b16 %v502
        %v761 = vunpack.c.h.b16 %v502
        %v762 = vunpack.c.l.b16 %v503
        %v763 = vunpack.c.h.b16 %v503
        %v764 = vunpack.c.l.b16 %v504
        %v765 = vunpack.c.h.b16 %v504
        %v766 = vunpack.c.l.b16 %v505
        %v767 = vunpack.c.h.b16 %v505
        %v768 = vunpack.c.l.b16 %v506
        %v769 = vunpack.c.h.b16 %v506
        %v770 = vunpack.c.l.b16 %v507
        %v771 = vunpack.c.h.b16 %v507
        %v772 = vunpack.c.l.b16 %v508
        %v773 = vunpack.c.h.b16 %v508
        %v774 = vunpack.c.l.b16 %v509
        %v775 = vunpack.c.h.b16 %v509
        %v776 = vunpack.c.l.b16 %v510
        %v777 = vunpack.c.h.b16 %v510
        %v778 = vunpack.c.l.b16 %v511
        %v779 = vunpack.c.h.b16 %v511
        %v780 = vunpack.c.l.b16 %v512
        %v781 = vunpack.c.h.b16 %v512
        %v782 = vunpack.c.l.b16 %v513
        %v783 = vunpack.c.h.b16 %v513
        %v784 = vunpack.c.l.b16 %v514
        %v785 = vunpack.c.h.b16 %v514
        %v786 = vunpack.c.l.b16 %v515
        %v787 = vunpack.c.h.b16 %v515
        %v788 = vunpack.c.l.b16 %v516
        %v789 = vunpack.c.h.b16 %v516
        %v790 = vunpack.c.l.b16 %v517
        %v791 = vunpack.c.h.b16 %v517
        %v792 = vunpack.c.l.b16 %v518
        %v793 = vunpack.c.h.b16 %v518
        %v794 = vunpack.c.l.b16 %v519
        %v795 = vunpack.c.h.b16 %v519
        %v796 = vunpack.c.l.b16 %v520
        %v797 = vunpack.c.h.b16 %v520
        %v798 = vunpack.c.l.b16 %v521
        %v799 = vunpack.c.h.b16 %v521
        %v800 = vunpack.c.l.b16 %v522
        %v801 = vunpack.c.h.b16 %v522
        %v802 = vunpack.c.l.b16 %v523
        %v803 = vunpack.c.h.b16 %v523
        %v804 = vunpack.c.l.b16 %v524
        %v805 = vunpack.c.h.b16 %v524
        %v806 = vunpack.c.l.b16 %v525
        %v807 = vunpack.c.h.b16 %v525
        %v808 = vunpack.c.l.b16 %v526
        %v809 = vunpack.c.h.b16 %v526
        %v810 = vunpack.c.l.b16 %v527
        %v811 = vunpack.c.h.b16 %v527
        %v812 = vunpack.c.l.b16 %v528
        %v813 = vunpack.c.h.b16 %v528
        %v814 = vunpack.c.l.b16 %v529
        %v815 = vunpack.c.h.b16 %v529
        %v816 = vunpack.c.l.b16 %v530
        %v817 = vunpack.c.h.b16 %v530
        %v818 = vunpack.c.l.b16 %v531
        %v819 = vunpack.c.h.b16 %v531
        %v820 = vunpack.c.l.b16 %v532
        %v821 = vunpack.c.h.b16 %v532
        %v822 = vunpack.c.l.b16 %v533
        %v823 = vunpack.c.h.b16 %v533
        %v824 = vunpack.c.l.b16 %v534
        %v825 = vunpack.c.h.b16 %v534
        %v826 = vunpack.c.l.b16 %v535
        %v827 = vunpack.c.h.b16 %v535
        %v828 = vunpack.c.l.b16 %v536
        %v829 = vunpack.c.h.b16 %v536
        %v830 = vunpack.c.l.b16 %v537
        %v831 = vunpack.c.h.b16 %v537
        %v832 = vunpack.c.l.b16 %v538
        %v833 = vunpack.c.h.b16 %v538
        %v834 = vunpack.c.l.b16 %v539
        %v835 = vunpack.c.h.b16 %v539
        %v836 = vunpack.c.l.b16 %v540
        %v837 = vunpack.c.h.b16 %v540
        %v838 = vunpack.c.l.b16 %v541
        %v839 = vunpack.c.h.b16 %v541
        %v840 = vunpack.c.l.b16 %v542
        %v841 = vunpack.c.h.b16 %v542
        %v842 = vunpack.c.l.b16 %v543
        %v843 = vunpack.c.h.b16 %v543
        %v844 = vunpack.c.l.b16 %v544
        %v845 = vunpack.c.h.b16 %v544
        %v846 = vunpack.c.l.b16 %v545
        %v847 = vunpack.c.h.b16 %v545
        %v848 = vunpack.c.l.b16 %v546
        %v849 = vunpack.c.h.b16 %v546
        %v850 = vunpack.c.l.b16 %v547
        %v851 = vunpack.c.h.b16 %v547
        %v852 = vunpack.c.l.b16 %v548
        %v853 = vunpack.c.h.b16 %v548
        %v854 = vunpack.c.l.b16 %v549
        %v855 = vunpack.c.h.b16 %v549
        %v856 = vpack.c.b16 %v662, %v660
        %v857 = vpack.c.b16 %v663, %v661
        %v858 = vpack.c.b16 %v666, %v664
        %v859 = vpack.c.b16 %v667, %v665
        %v860 = vpack.c.b16 %v670, %v668
        %v861 = vpack.c.b16 %v671, %v669
        %v862 = vpack.c.b16 %v674, %v672
        %v863 = vpack.c.b16 %v675, %v673
        %v864 = vpack.c.b16 %v678, %v676
        %v865 = vpack.c.b16 %v679, %v677
        %v866 = vpack.c.b16 %v682, %v680
        %v867 = vpack.c.b16 %v683, %v681
        %v868 = vpack.c.b16 %v686, %v684
        %v869 = vpack.c.b16 %v687, %v685
        %v870 = vpack.c.b16 %v690, %v688
        %v871 = vpack.c.b16 %v691, %v689
        %v872 = vpack.c.b16 %v694, %v692
        %v873 = vpack.c.b16 %v695, %v693
        %v874 = vpack.c.b16 %v698, %v696
        %v875 = vpack.c.b16 %v699, %v697
        %v876 = vpack.c.b16 %v702, %v700
        %v877 = vpack.c.b16 %v703, %v701
        %v878 = vpack.c.b16 %v706, %v704
        %v879 = vpack.c.b16 %v707, %v705
        %v880 = vpack.c.b16 %v710, %v708
        %v881 = vpack.c.b16 %v711, %v709
        %v882 = vpack.c.b16 %v714, %v712
        %v883 = vpack.c.b16 %v715, %v713
        %v884 = vpack.c.b16 %v718, %v716
        %v885 = vpack.c.b16 %v719, %v717
        %v886 = vpack.c.b16 %v722, %v720
        %v887 = vpack.c.b16 %v723, %v721
        %v888 = vpack.c.b16 %v726, %v724
        %v889 = vpack.c.b16 %v727, %v725
        %v890 = vpack.c.b16 %v730, %v728
        %v891 = vpack.c.b16 %v731, %v729
        %v892 = vpack.c.b16 %v734, %v732
        %v893 = vpack.c.b16 %v735, %v733
        %v894 = vpack.c.b16 %v738, %v736
        %v895 = vpack.c.b16 %v739, %v737
        %v896 = vpack.c.b16 %v742, %v740
        %v897 = vpack.c.b16 %v743, %v741
        %v898 = vpack.c.b16 %v746, %v744
        %v899 = vpack.c.b16 %v747, %v745
        %v900 = vpack.c.b16 %v750, %v748
        %v901 = vpack.c.b16 %v751, %v749
        %v902 = vpack.c.b16 %v754, %v752
        %v903 = vpack.c.b16 %v755, %v753
        %v904 = vpack.c.b16 %v758, %v756
        %v905 = vpack.c.b16 %v759, %v757
        %v906 = vpack.c.b16 %v762, %v760
        %v907 = vpack.c.b16 %v763, %v761
        %v908 = vpack.c.b16 %v766, %v764
        %v909 = vpack.c.b16 %v767, %v765
        %v910 = vpack.c.b16 %v770, %v768
        %v911 = vpack.c.b16 %v771, %v769
        %v912 = vpack.c.b16 %v774, %v772
        %v913 = vpack.c.b16 %v775, %v773
        %v914 = vpack.c.b16 %v778, %v776
        %v915 = vpack.c.b16 %v779, %v777
        %v916 = vpack.c.b16 %v782, %v780
        %v917 = vpack.c.b16 %v783, %v781
        %v918 = vpack.c.b16 %v786, %v784
        %v919 = vpack.c.b16 %v787, %v785
        %v920 = vpack.c.b16 %v790, %v788
        %v921 = vpack.c.b16 %v791, %v789
        %v922 = vpack.c.b16 %v794, %v792
        %v923 = vpack.c.b16 %v795, %v793
        %v924 = vpack.c.b16 %v798, %v796
        %v925 = vpack.c.b16 %v799, %v797
        %v926 = vpack.c.b16 %v802, %v800
        %v927 = vpack.c.b16 %v803, %v801
        %v928 = vpack.c.b16 %v806, %v804
        %v929 = vpack.c.b16 %v807, %v805
        %v930 = vpack.c.b16 %v810, %v808
        %v931 = vpack.c.b16 %v811, %v809
        %v932 = vpack.c.b16 %v814, %v812
        %v933 = vpack.c.b16 %v815, %v813
        %v934 = vpack.c.b16 %v818, %v816
        %v935 = vpack.c.b16 %v819, %v817
        %v936 = vpack.c.b16 %v822, %v820
        %v937 = vpack.c.b16 %v823, %v821
        %v938 = vpack.c.b16 %v826, %v824
        %v939 = vpack.c.b16 %v827, %v825
        %v940 = vpack.c.b16 %v830, %v828
        %v941 = vpack.c.b16 %v831, %v829
        %v942 = vpack.c.b16 %v834, %v832
        %v943 = vpack.c.b16 %v835, %v833
        %v944 = vpack.c.b16 %v838, %v836
        %v945 = vpack.c.b16 %v839, %v837
        %v946 = vpack.c.b16 %v842, %v840
        %v947 = vpack.c.b16 %v843, %v841
        %v948 = vpack.c.b16 %v846, %v844
        %v949 = vpack.c.b16 %v847, %v845
        %v950 = vpack.c.b16 %v850, %v848
        %v951 = vpack.c.b16 %v851, %v849
        %v952 = vpack.c.b16 %v854, %v852
        %v953 = vpack.c.b16 %v855, %v853
        %vm1052 = vcmask 130048
        %v1054 = vsel %vm1052, %v402, 0
        %v1057 = vsel %vm1052, %v409, 0
        %v1060 = vsel %vm1052, %v416, 0
        %v1063 = vsel %vm1052, %v423, 0
        %v1066 = vsel %vm1052, %v430, 0
        %v1069 = vsel %vm1052, %v437, 0
        %v1072 = vsel %vm1052, %v444, 0
        %v1075 = vsel %vm1052, %v451, 0
        %1077 = vmatprep.subr.bf16.mxu0 %v857
        %1078 = vmatpush1.bf16.msra.mxu0 %v856
        %1079 = vmatprep.subr.bf16.mxu0 %v859
        %1080 = vmatpush1.bf16.msra.mxu0 %v858
        %1081 = vmatprep.subr.bf16.mxu0 %v861
        %1082 = vmatpush1.bf16.msra.mxu0 %v860
        %1083 = vmatprep.subr.bf16.mxu0 %v863
        %1084 = vmatpush1.bf16.msra.mxu0 %v862
        %1085 = vmatprep.subr.bf16.mxu0 %v865
        %1086 = vmatpush1.bf16.msra.mxu0 %v864
        %1087 = vmatprep.subr.bf16.mxu0 %v867
        %1088 = vmatpush1.bf16.msra.mxu0 %v866
        %1089 = vmatprep.subr.bf16.mxu0 %v869
        %1090 = vmatpush1.bf16.msra.mxu0 %v868
        %1091 = vmatprep.subr.bf16.mxu0 %v871
        %1092 = vmatpush1.bf16.msra.mxu0 %v870
        %1093 = vmatprep.subr.bf16.mxu0 %v873
        %1094 = vmatpush1.bf16.msra.mxu0 %v872
        %1095 = vmatprep.subr.bf16.mxu0 %v875
        %1096 = vmatpush1.bf16.msra.mxu0 %v874
        %1097 = vmatprep.subr.bf16.mxu0 %v877
        %1098 = vmatpush1.bf16.msra.mxu0 %v876
        %1099 = vmatprep.subr.bf16.mxu0 %v879
        %1100 = vmatpush1.bf16.msra.mxu0 %v878
        %1101 = vmatprep.subr.bf16.mxu0 %v881
        %1102 = vmatpush1.bf16.msra.mxu0 %v880
        %1103 = vmatprep.subr.bf16.mxu0 %v883
        %1104 = vmatpush1.bf16.msra.mxu0 %v882
        %1105 = vmatprep.subr.bf16.mxu0 %v885
        %1106 = vmatpush1.bf16.msra.mxu0 %v884
        %1107 = vmatprep.subr.bf16.mxu0 %v887
        %1108 = vmatpush1.bf16.msra.mxu0 %v886
        %1109 = vmatprep.mubr.bf16.mxu0 %v397
        %1110 = vmatmul.mubr.bf16.gmra.mrb[0].mxu0 %v396
        %v1111 = vpop.f32.mrb[0].mxu0
        %v1112 = vadd.f32 %v555, %v1111
        %v1113 = vpop.f32.mrb[0].mxu0
        %v1114 = vadd.f32 %v559, %v1113
        %v1115 = vpop.f32.mrb[0].mxu0
        %v1116 = vadd.f32 %v555, %v1115
        %v1117 = vpop.f32.mrb[0].mxu0
        %v1118 = vadd.f32 %v559, %v1117
        %1119 = vmatprep.mubr.bf16.mxu0 %v404
        %1120 = vmatmul.mubr.bf16.gmra.mrb[0].mxu0 %v403
        %v1121 = vpop.f32.mrb[0].mxu0
        %v1122 = vadd.f32 %v555, %v1121
        %v1123 = vpop.f32.mrb[0].mxu0
        %v1124 = vadd.f32 %v559, %v1123
        %v1125 = vpop.f32.mrb[0].mxu0
        %v1126 = vadd.f32 %v555, %v1125
        %v1127 = vpop.f32.mrb[0].mxu0
        %v1128 = vadd.f32 %v559, %v1127
        %1129 = vmatprep.mubr.bf16.mxu0 %v411
        %1130 = vmatmul.mubr.bf16.gmra.mrb[0].mxu0 %v410
        %v1131 = vpop.f32.mrb[0].mxu0
        %v1132 = vadd.f32 %v555, %v1131
        %v1133 = vpop.f32.mrb[0].mxu0
        %v1134 = vadd.f32 %v559, %v1133
        %v1135 = vpop.f32.mrb[0].mxu0
        %v1136 = vadd.f32 %v555, %v1135
        %v1137 = vpop.f32.mrb[0].mxu0
        %v1138 = vadd.f32 %v559, %v1137
        %1139 = vmatprep.mubr.bf16.mxu0 %v418
        %1140 = vmatmul.mubr.bf16.gmra.mrb[0].mxu0 %v417
        %v1141 = vpop.f32.mrb[0].mxu0
        %v1142 = vadd.f32 %v555, %v1141
        %v1143 = vpop.f32.mrb[0].mxu0
        %v1144 = vadd.f32 %v559, %v1143
        %v1145 = vpop.f32.mrb[0].mxu0
        %v1146 = vadd.f32 %v555, %v1145
        %v1147 = vpop.f32.mrb[0].mxu0
        %v1148 = vadd.f32 %v559, %v1147
        %1149 = vmatprep.mubr.bf16.mxu0 %v425
        %1150 = vmatmul.mubr.bf16.gmra.mrb[0].mxu0 %v424
        %v1151 = vpop.f32.mrb[0].mxu0
        %v1152 = vadd.f32 %v555, %v1151
        %v1153 = vpop.f32.mrb[0].mxu0
        %v1154 = vadd.f32 %v559, %v1153
        %v1155 = vpop.f32.mrb[0].mxu0
        %v1156 = vadd.f32 %v555, %v1155
        %v1157 = vpop.f32.mrb[0].mxu0
        %v1158 = vadd.f32 %v559, %v1157
        %1159 = vmatprep.mubr.bf16.mxu0 %v432
        %1160 = vmatmul.mubr.bf16.gmra.mrb[0].mxu0 %v431
        %v1161 = vpop.f32.mrb[0].mxu0
        %v1162 = vadd.f32 %v555, %v1161
        %v1163 = vpop.f32.mrb[0].mxu0
        %v1164 = vadd.f32 %v559, %v1163
        %v1165 = vpop.f32.mrb[0].mxu0
        %v1166 = vadd.f32 %v555, %v1165
        %v1167 = vpop.f32.mrb[0].mxu0
        %v1168 = vadd.f32 %v559, %v1167
        %1169 = vmatprep.mubr.bf16.mxu0 %v439
        %1170 = vmatmul.mubr.bf16.gmra.mrb[0].mxu0 %v438
        %v1171 = vpop.f32.mrb[0].mxu0
        %v1172 = vadd.f32 %v555, %v1171
        %v1173 = vpop.f32.mrb[0].mxu0
        %v1174 = vadd.f32 %v559, %v1173
        %v1175 = vpop.f32.mrb[0].mxu0
        %v1176 = vadd.f32 %v555, %v1175
        %v1177 = vpop.f32.mrb[0].mxu0
        %v1178 = vadd.f32 %v559, %v1177
        %1179 = vmatprep.mubr.bf16.mxu0 %v446
        %1180 = vmatmul.mubr.bf16.gmra.mrb[0].mxu0 %v445
        %v1181 = vpop.f32.mrb[0].mxu0
        %v1182 = vadd.f32 %v555, %v1181
        %v1183 = vpop.f32.mrb[0].mxu0
        %v1184 = vadd.f32 %v559, %v1183
        %v1185 = vpop.f32.mrb[0].mxu0
        %v1186 = vadd.f32 %v555, %v1185
        %v1187 = vpop.f32.mrb[0].mxu0
        %v1188 = vadd.f32 %v559, %v1187
        %1189 = vdwg.mxu0
        %1190 = vmatprep.subr.bf16.mxu0 %v889
        %1191 = vmatpush1.bf16.msra.mxu0 %v888
        %1192 = vmatprep.subr.bf16.mxu0 %v891
        %1193 = vmatpush1.bf16.msra.mxu0 %v890
        %1194 = vmatprep.subr.bf16.mxu0 %v893
        %1195 = vmatpush1.bf16.msra.mxu0 %v892
        %1196 = vmatprep.subr.bf16.mxu0 %v895
        %1197 = vmatpush1.bf16.msra.mxu0 %v894
        %1198 = vmatprep.subr.bf16.mxu0 %v897
        %1199 = vmatpush1.bf16.msra.mxu0 %v896
        %1200 = vmatprep.subr.bf16.mxu0 %v899
        %1201 = vmatpush1.bf16.msra.mxu0 %v898
        %1202 = vmatprep.subr.bf16.mxu0 %v901
        %1203 = vmatpush1.bf16.msra.mxu0 %v900
        %1204 = vmatprep.subr.bf16.mxu0 %v903
        %1205 = vmatpush1.bf16.msra.mxu0 %v902
        %1206 = vmatprep.subr.bf16.mxu0 %v905
        %1207 = vmatpush1.bf16.msra.mxu0 %v904
        %1208 = vmatprep.subr.bf16.mxu0 %v907
        %1209 = vmatpush1.bf16.msra.mxu0 %v906
        %1210 = vmatprep.subr.bf16.mxu0 %v909
        %1211 = vmatpush1.bf16.msra.mxu0 %v908
        %1212 = vmatprep.subr.bf16.mxu0 %v911
        %1213 = vmatpush1.bf16.msra.mxu0 %v910
        %1214 = vmatprep.subr.bf16.mxu0 %v913
        %1215 = vmatpush1.bf16.msra.mxu0 %v912
        %1216 = vmatprep.subr.bf16.mxu0 %v915
        %1217 = vmatpush1.bf16.msra.mxu0 %v914
        %1218 = vmatprep.subr.bf16.mxu0 %v917
        %1219 = vmatpush1.bf16.msra.mxu0 %v916
        %1220 = vmatprep.subr.bf16.mxu0 %v919
        %1221 = vmatpush1.bf16.msra.mxu0 %v918
        %1222 = vmatprep.mubr.bf16.mxu0 %v399
        %1223 = vmatmul.mubr.bf16.gmra.mrb[0].mxu0 %v398
        %v1224 = vpop.f32.mrb[0].mxu0
        %v1225 = vadd.f32 %v1112, %v1224
        %v1226 = vpop.f32.mrb[0].mxu0
        %v1227 = vadd.f32 %v1114, %v1226
        %v1228 = vpop.f32.mrb[0].mxu0
        %v1229 = vadd.f32 %v1116, %v1228
        %v1230 = vpop.f32.mrb[0].mxu0
        %v1231 = vadd.f32 %v1118, %v1230
        %1232 = vmatprep.mubr.bf16.mxu0 %v406
        %1233 = vmatmul.mubr.bf16.gmra.mrb[0].mxu0 %v405
        %v1234 = vpop.f32.mrb[0].mxu0
        %v1235 = vadd.f32 %v1122, %v1234
        %v1236 = vpop.f32.mrb[0].mxu0
        %v1237 = vadd.f32 %v1124, %v1236
        %v1238 = vpop.f32.mrb[0].mxu0
        %v1239 = vadd.f32 %v1126, %v1238
        %v1240 = vpop.f32.mrb[0].mxu0
        %v1241 = vadd.f32 %v1128, %v1240
        %1242 = vmatprep.mubr.bf16.mxu0 %v413
        %1243 = vmatmul.mubr.bf16.gmra.mrb[0].mxu0 %v412
        %v1244 = vpop.f32.mrb[0].mxu0
        %v1245 = vadd.f32 %v1132, %v1244
        %v1246 = vpop.f32.mrb[0].mxu0
        %v1247 = vadd.f32 %v1134, %v1246
        %v1248 = vpop.f32.mrb[0].mxu0
        %v1249 = vadd.f32 %v1136, %v1248
        %v1250 = vpop.f32.mrb[0].mxu0
        %v1251 = vadd.f32 %v1138, %v1250
        %1252 = vmatprep.mubr.bf16.mxu0 %v420
        %1253 = vmatmul.mubr.bf16.gmra.mrb[0].mxu0 %v419
        %v1254 = vpop.f32.mrb[0].mxu0
        %v1255 = vadd.f32 %v1142, %v1254
        %v1256 = vpop.f32.mrb[0].mxu0
        %v1257 = vadd.f32 %v1144, %v1256
        %v1258 = vpop.f32.mrb[0].mxu0
        %v1259 = vadd.f32 %v1146, %v1258
        %v1260 = vpop.f32.mrb[0].mxu0
        %v1261 = vadd.f32 %v1148, %v1260
        %1262 = vmatprep.mubr.bf16.mxu0 %v427
        %1263 = vmatmul.mubr.bf16.gmra.mrb[0].mxu0 %v426
        %v1264 = vpop.f32.mrb[0].mxu0
        %v1265 = vadd.f32 %v1152, %v1264
        %v1266 = vpop.f32.mrb[0].mxu0
        %v1267 = vadd.f32 %v1154, %v1266
        %v1268 = vpop.f32.mrb[0].mxu0
        %v1269 = vadd.f32 %v1156, %v1268
        %v1270 = vpop.f32.mrb[0].mxu0
        %v1271 = vadd.f32 %v1158, %v1270
        %1272 = vmatprep.mubr.bf16.mxu0 %v434
        %1273 = vmatmul.mubr.bf16.gmra.mrb[0].mxu0 %v433
        %v1274 = vpop.f32.mrb[0].mxu0
        %v1275 = vadd.f32 %v1162, %v1274
        %v1276 = vpop.f32.mrb[0].mxu0
        %v1277 = vadd.f32 %v1164, %v1276
        %v1278 = vpop.f32.mrb[0].mxu0
        %v1279 = vadd.f32 %v1166, %v1278
        %v1280 = vpop.f32.mrb[0].mxu0
        %v1281 = vadd.f32 %v1168, %v1280
        %1282 = vmatprep.mubr.bf16.mxu0 %v441
        %1283 = vmatmul.mubr.bf16.gmra.mrb[0].mxu0 %v440
        %v1284 = vpop.f32.mrb[0].mxu0
        %v1285 = vadd.f32 %v1172, %v1284
        %v1286 = vpop.f32.mrb[0].mxu0
        %v1287 = vadd.f32 %v1174, %v1286
        %v1288 = vpop.f32.mrb[0].mxu0
        %v1289 = vadd.f32 %v1176, %v1288
        %v1290 = vpop.f32.mrb[0].mxu0
        %v1291 = vadd.f32 %v1178, %v1290
        %1292 = vmatprep.mubr.bf16.mxu0 %v448
        %1293 = vmatmul.mubr.bf16.gmra.mrb[0].mxu0 %v447
        %v1294 = vpop.f32.mrb[0].mxu0
        %v1295 = vadd.f32 %v1182, %v1294
        %v1296 = vpop.f32.mrb[0].mxu0
        %v1297 = vadd.f32 %v1184, %v1296
        %v1298 = vpop.f32.mrb[0].mxu0
        %v1299 = vadd.f32 %v1186, %v1298
        %v1300 = vpop.f32.mrb[0].mxu0
        %v1301 = vadd.f32 %v1188, %v1300
        %1302 = vdwg.mxu0
        %1303 = vmatprep.subr.bf16.mxu0 %v921
        %1304 = vmatpush1.bf16.msra.mxu0 %v920
        %1305 = vmatprep.subr.bf16.mxu0 %v923
        %1306 = vmatpush1.bf16.msra.mxu0 %v922
        %1307 = vmatprep.subr.bf16.mxu0 %v925
        %1308 = vmatpush1.bf16.msra.mxu0 %v924
        %1309 = vmatprep.subr.bf16.mxu0 %v927
        %1310 = vmatpush1.bf16.msra.mxu0 %v926
        %1311 = vmatprep.subr.bf16.mxu0 %v929
        %1312 = vmatpush1.bf16.msra.mxu0 %v928
        %1313 = vmatprep.subr.bf16.mxu0 %v931
        %1314 = vmatpush1.bf16.msra.mxu0 %v930
        %1315 = vmatprep.subr.bf16.mxu0 %v933
        %1316 = vmatpush1.bf16.msra.mxu0 %v932
        %1317 = vmatprep.subr.bf16.mxu0 %v935
        %1318 = vmatpush1.bf16.msra.mxu0 %v934
        %1319 = vmatprep.subr.bf16.mxu0 %v937
        %1320 = vmatpush1.bf16.msra.mxu0 %v936
        %1321 = vmatprep.subr.bf16.mxu0 %v939
        %1322 = vmatpush1.bf16.msra.mxu0 %v938
        %1323 = vmatprep.subr.bf16.mxu0 %v941
        %1324 = vmatpush1.bf16.msra.mxu0 %v940
        %1325 = vmatprep.subr.bf16.mxu0 %v943
        %1326 = vmatpush1.bf16.msra.mxu0 %v942
        %1327 = vmatprep.subr.bf16.mxu0 %v945
        %1328 = vmatpush1.bf16.msra.mxu0 %v944
        %1329 = vmatprep.subr.bf16.mxu0 %v947
        %1330 = vmatpush1.bf16.msra.mxu0 %v946
        %1331 = vmatprep.subr.bf16.mxu0 %v949
        %1332 = vmatpush1.bf16.msra.mxu0 %v948
        %1333 = vmatprep.subr.bf16.mxu0 %v951
        %1334 = vmatpush1.bf16.msra.mxu0 %v950
        %1335 = vmatprep.mubr.bf16.mxu0 %v401
        %1336 = vmatmul.mubr.bf16.gmra.mrb[0].mxu0 %v400
        %v1337 = vpop.f32.mrb[0].mxu0
        %v1338 = vadd.f32 %v1225, %v1337
        %v1339 = vpop.f32.mrb[0].mxu0
        %v1340 = vadd.f32 %v1227, %v1339
        %v1341 = vpop.f32.mrb[0].mxu0
        %v1342 = vadd.f32 %v1229, %v1341
        %v1343 = vpop.f32.mrb[0].mxu0
        %v1344 = vadd.f32 %v1231, %v1343
        %1345 = vmatprep.mubr.bf16.mxu0 %v408
        %1346 = vmatmul.mubr.bf16.gmra.mrb[0].mxu0 %v407
        %v1347 = vpop.f32.mrb[0].mxu0
        %v1348 = vadd.f32 %v1235, %v1347
        %v1349 = vpop.f32.mrb[0].mxu0
        %v1350 = vadd.f32 %v1237, %v1349
        %v1351 = vpop.f32.mrb[0].mxu0
        %v1352 = vadd.f32 %v1239, %v1351
        %v1353 = vpop.f32.mrb[0].mxu0
        %v1354 = vadd.f32 %v1241, %v1353
        %1355 = vmatprep.mubr.bf16.mxu0 %v415
        %1356 = vmatmul.mubr.bf16.gmra.mrb[0].mxu0 %v414
        %v1357 = vpop.f32.mrb[0].mxu0
        %v1358 = vadd.f32 %v1245, %v1357
        %v1359 = vpop.f32.mrb[0].mxu0
        %v1360 = vadd.f32 %v1247, %v1359
        %v1361 = vpop.f32.mrb[0].mxu0
        %v1362 = vadd.f32 %v1249, %v1361
        %v1363 = vpop.f32.mrb[0].mxu0
        %v1364 = vadd.f32 %v1251, %v1363
        %1365 = vmatprep.mubr.bf16.mxu0 %v422
        %1366 = vmatmul.mubr.bf16.gmra.mrb[0].mxu0 %v421
        %v1367 = vpop.f32.mrb[0].mxu0
        %v1368 = vadd.f32 %v1255, %v1367
        %v1369 = vpop.f32.mrb[0].mxu0
        %v1370 = vadd.f32 %v1257, %v1369
        %v1371 = vpop.f32.mrb[0].mxu0
        %v1372 = vadd.f32 %v1259, %v1371
        %v1373 = vpop.f32.mrb[0].mxu0
        %v1374 = vadd.f32 %v1261, %v1373
        %1375 = vmatprep.mubr.bf16.mxu0 %v429
        %1376 = vmatmul.mubr.bf16.gmra.mrb[0].mxu0 %v428
        %v1377 = vpop.f32.mrb[0].mxu0
        %v1378 = vadd.f32 %v1265, %v1377
        %v1379 = vpop.f32.mrb[0].mxu0
        %v1380 = vadd.f32 %v1267, %v1379
        %v1381 = vpop.f32.mrb[0].mxu0
        %v1382 = vadd.f32 %v1269, %v1381
        %v1383 = vpop.f32.mrb[0].mxu0
        %v1384 = vadd.f32 %v1271, %v1383
        %1385 = vmatprep.mubr.bf16.mxu0 %v436
        %1386 = vmatmul.mubr.bf16.gmra.mrb[0].mxu0 %v435
        %v1387 = vpop.f32.mrb[0].mxu0
        %v1388 = vadd.f32 %v1275, %v1387
        %v1389 = vpop.f32.mrb[0].mxu0
        %v1390 = vadd.f32 %v1277, %v1389
        %v1391 = vpop.f32.mrb[0].mxu0
        %v1392 = vadd.f32 %v1279, %v1391
        %v1393 = vpop.f32.mrb[0].mxu0
        %v1394 = vadd.f32 %v1281, %v1393
        %1395 = vmatprep.mubr.bf16.mxu0 %v443
        %1396 = vmatmul.mubr.bf16.gmra.mrb[0].mxu0 %v442
        %v1397 = vpop.f32.mrb[0].mxu0
        %v1398 = vadd.f32 %v1285, %v1397
        %v1399 = vpop.f32.mrb[0].mxu0
        %v1400 = vadd.f32 %v1287, %v1399
        %v1401 = vpop.f32.mrb[0].mxu0
        %v1402 = vadd.f32 %v1289, %v1401
        %v1403 = vpop.f32.mrb[0].mxu0
        %v1404 = vadd.f32 %v1291, %v1403
        %1405 = vmatprep.mubr.bf16.mxu0 %v450
        %1406 = vmatmul.mubr.bf16.gmra.mrb[0].mxu0 %v449
        %v1407 = vpop.f32.mrb[0].mxu0
        %v1408 = vadd.f32 %v1295, %v1407
        %v1409 = vpop.f32.mrb[0].mxu0
        %v1410 = vadd.f32 %v1297, %v1409
        %v1411 = vpop.f32.mrb[0].mxu0
        %v1412 = vadd.f32 %v1299, %v1411
        %v1413 = vpop.f32.mrb[0].mxu0
        %v1414 = vadd.f32 %v1301, %v1413
        %1415 = vdwg.mxu0
        %1416 = vmatprep.subr.bf16.mxu0 %v953
        %1417 = vmatpush1.bf16.msra.mxu0 %v952
        %1418 = vmatprep.subr.bf16.mxu0 0
        %1419 = vmatpush1.bf16.msra.mxu0 0
        %1420 = vmatprep.subr.bf16.mxu0 0
        %1421 = vmatpush1.bf16.msra.mxu0 0
        %1422 = vmatprep.subr.bf16.mxu0 0
        %1423 = vmatpush1.bf16.msra.mxu0 0
        %1424 = vmatprep.subr.bf16.mxu0 0
        %1425 = vmatpush1.bf16.msra.mxu0 0
        %1426 = vmatprep.subr.bf16.mxu0 0
        %1427 = vmatpush1.bf16.msra.mxu0 0
        %1428 = vmatprep.subr.bf16.mxu0 0
        %1429 = vmatpush1.bf16.msra.mxu0 0
        %1430 = vmatprep.subr.bf16.mxu0 0
        %1431 = vmatpush1.bf16.msra.mxu0 0
        %1432 = vmatprep.subr.bf16.mxu0 0
        %1433 = vmatpush1.bf16.msra.mxu0 0
        %1434 = vmatprep.subr.bf16.mxu0 0
        %1435 = vmatpush1.bf16.msra.mxu0 0
        %1436 = vmatprep.subr.bf16.mxu0 0
        %1437 = vmatpush1.bf16.msra.mxu0 0
        %1438 = vmatprep.subr.bf16.mxu0 0
        %1439 = vmatpush1.bf16.msra.mxu0 0
        %1440 = vmatprep.subr.bf16.mxu0 0
        %1441 = vmatpush1.bf16.msra.mxu0 0
        %1442 = vmatprep.subr.bf16.mxu0 0
        %1443 = vmatpush1.bf16.msra.mxu0 0
        %1444 = vmatprep.subr.bf16.mxu0 0
        %1445 = vmatpush1.bf16.msra.mxu0 0
        %1446 = vmatprep.subr.bf16.mxu0 0
        %1447 = vmatpush1.bf16.msra.mxu0 0
        %1448 = vmatprep.mubr.bf16.mxu0 0
        %1449 = vmatmul.mubr.bf16.gmra.mrb[0].mxu0 %v1054
        %v1450 = vpop.f32.mrb[0].mxu0
        %v1451 = vadd.f32 %v1338, %v1450
        %v1452 = vpop.f32.mrb[0].mxu0
        %v1453 = vadd.f32 %v1340, %v1452
        %v1454 = vpop.f32.mrb[0].mxu0
        %v1455 = vadd.f32 %v1342, %v1454
        %v1456 = vpop.f32.mrb[0].mxu0
        %v1457 = vadd.f32 %v1344, %v1456
        %1458 = vmatprep.mubr.bf16.mxu0 0
        %1459 = vmatmul.mubr.bf16.gmra.mrb[0].mxu0 %v1057
        %v1460 = vpop.f32.mrb[0].mxu0
        %v1461 = vadd.f32 %v1348, %v1460
        %v1462 = vpop.f32.mrb[0].mxu0
        %v1463 = vadd.f32 %v1350, %v1462
        %v1464 = vpop.f32.mrb[0].mxu0
        %v1465 = vadd.f32 %v1352, %v1464
        %v1466 = vpop.f32.mrb[0].mxu0
        %v1467 = vadd.f32 %v1354, %v1466
        %1468 = vmatprep.mubr.bf16.mxu0 0
        %1469 = vmatmul.mubr.bf16.gmra.mrb[0].mxu0 %v1060
        %v1470 = vpop.f32.mrb[0].mxu0
        %v1471 = vadd.f32 %v1358, %v1470
        %v1472 = vpop.f32.mrb[0].mxu0
        %v1473 = vadd.f32 %v1360, %v1472
        %v1474 = vpop.f32.mrb[0].mxu0
        %v1475 = vadd.f32 %v1362, %v1474
        %v1476 = vpop.f32.mrb[0].mxu0
        %v1477 = vadd.f32 %v1364, %v1476
        %1478 = vmatprep.mubr.bf16.mxu0 0
        %1479 = vmatmul.mubr.bf16.gmra.mrb[0].mxu0 %v1063
        %v1480 = vpop.f32.mrb[0].mxu0
        %v1481 = vadd.f32 %v1368, %v1480
        %v1482 = vpop.f32.mrb[0].mxu0
        %v1483 = vadd.f32 %v1370, %v1482
        %v1484 = vpop.f32.mrb[0].mxu0
        %v1485 = vadd.f32 %v1372, %v1484
        %v1486 = vpop.f32.mrb[0].mxu0
        %v1487 = vadd.f32 %v1374, %v1486
        %1488 = vmatprep.mubr.bf16.mxu0 0
        %1489 = vmatmul.mubr.bf16.gmra.mrb[0].mxu0 %v1066
        %v1490 = vpop.f32.mrb[0].mxu0
        %v1491 = vadd.f32 %v1378, %v1490
        %v1492 = vpop.f32.mrb[0].mxu0
        %v1493 = vadd.f32 %v1380, %v1492
        %v1494 = vpop.f32.mrb[0].mxu0
        %v1495 = vadd.f32 %v1382, %v1494
        %v1496 = vpop.f32.mrb[0].mxu0
        %v1497 = vadd.f32 %v1384, %v1496
        %1498 = vmatprep.mubr.bf16.mxu0 0
        %1499 = vmatmul.mubr.bf16.gmra.mrb[0].mxu0 %v1069
        %v1500 = vpop.f32.mrb[0].mxu0
        %v1501 = vadd.f32 %v1388, %v1500
        %v1502 = vpop.f32.mrb[0].mxu0
        %v1503 = vadd.f32 %v1390, %v1502
        %v1504 = vpop.f32.mrb[0].mxu0
        %v1505 = vadd.f32 %v1392, %v1504
        %v1506 = vpop.f32.mrb[0].mxu0
        %v1507 = vadd.f32 %v1394, %v1506
        %1508 = vmatprep.mubr.bf16.mxu0 0
        %1509 = vmatmul.mubr.bf16.gmra.mrb[0].mxu0 %v1072
        %v1510 = vpop.f32.mrb[0].mxu0
        %v1511 = vadd.f32 %v1398, %v1510
        %v1512 = vpop.f32.mrb[0].mxu0
        %v1513 = vadd.f32 %v1400, %v1512
        %v1514 = vpop.f32.mrb[0].mxu0
        %v1515 = vadd.f32 %v1402, %v1514
        %v1516 = vpop.f32.mrb[0].mxu0
        %v1517 = vadd.f32 %v1404, %v1516
        %1518 = vmatprep.mubr.bf16.mxu0 0
        %1519 = vmatmul.mubr.bf16.gmra.mrb[0].mxu0 %v1075
        %v1520 = vpop.f32.mrb[0].mxu0
        %v1521 = vadd.f32 %v1408, %v1520
        %v1522 = vpop.f32.mrb[0].mxu0
        %v1523 = vadd.f32 %v1410, %v1522
        %v1524 = vpop.f32.mrb[0].mxu0
        %v1525 = vadd.f32 %v1412, %v1524
        %v1526 = vpop.f32.mrb[0].mxu0
        %v1527 = vadd.f32 %v1414, %v1526
        %1528 = vdwg.mxu0
        %v1529 = vmax.f32 %v1451, 0.0
        %v1530 = vmax.f32 %v1453, 0.0
        %v1531 = vmax.f32 %v1455, 0.0
        %v1532 = vmax.f32 %v1457, 0.0
        %v1533 = vmax.f32 %v1461, 0.0
        %v1534 = vmax.f32 %v1463, 0.0
        %v1535 = vmax.f32 %v1465, 0.0
        %v1536 = vmax.f32 %v1467, 0.0
        %v1537 = vmax.f32 %v1471, 0.0
        %v1538 = vmax.f32 %v1473, 0.0
        %v1539 = vmax.f32 %v1475, 0.0
        %v1540 = vmax.f32 %v1477, 0.0
        %v1541 = vmax.f32 %v1481, 0.0
        %v1542 = vmax.f32 %v1483, 0.0
        %v1543 = vmax.f32 %v1485, 0.0
        %v1544 = vmax.f32 %v1487, 0.0
        %v1545 = vmax.f32 %v1491, 0.0
        %v1546 = vmax.f32 %v1493, 0.0
        %v1547 = vmax.f32 %v1495, 0.0
        %v1548 = vmax.f32 %v1497, 0.0
        %v1549 = vmax.f32 %v1501, 0.0
        %v1550 = vmax.f32 %v1503, 0.0
        %v1551 = vmax.f32 %v1505, 0.0
        %v1552 = vmax.f32 %v1507, 0.0
        %v1553 = vmax.f32 %v1511, 0.0
        %v1554 = vmax.f32 %v1513, 0.0
        %v1555 = vmax.f32 %v1515, 0.0
        %v1556 = vmax.f32 %v1517, 0.0
        %v1557 = vmax.f32 %v1521, 0.0
        %v1558 = vmax.f32 %v1523, 0.0
        %v1559 = vmax.f32 %v1525, 0.0
        %v1560 = vmax.f32 %v1527, 0.0
        %v1561 = vpack.c.bf16 %v1531, %v1529
        %v1562 = vpack.c.bf16 %v1532, %v1530
        %v1563 = vpack.c.bf16 %v1535, %v1533
        %v1564 = vpack.c.bf16 %v1536, %v1534
        %v1565 = vpack.c.bf16 %v1539, %v1537
        %v1566 = vpack.c.bf16 %v1540, %v1538
        %v1567 = vpack.c.bf16 %v1543, %v1541
        %v1568 = vpack.c.bf16 %v1544, %v1542
        %v1569 = vpack.c.bf16 %v1547, %v1545
        %v1570 = vpack.c.bf16 %v1548, %v1546
        %v1571 = vpack.c.bf16 %v1551, %v1549
        %v1572 = vpack.c.bf16 %v1552, %v1550
        %v1573 = vpack.c.bf16 %v1555, %v1553
        %v1574 = vpack.c.bf16 %v1556, %v1554
        %v1575 = vpack.c.bf16 %v1559, %v1557
        %v1576 = vpack.c.bf16 %v1560, %v1558
        %v1577 = vld [vmem:[%s3] sm:$0xf]
        %v1578 = vld [vmem:[%s3 + $0x4] sm:$0xf]
        %v1579 = vld [vmem:[%s3 + $0x8] sm:$0xf]
        %v1580 = vld [vmem:[%s3 + $0xc] sm:$0xf]
        %v1581 = vld [vmem:[%s3 + $0x10] sm:$0xf]
        %v1582 = vld [vmem:[%s3 + $0x14] sm:$0xf]
        %v1583 = vld [vmem:[%s3 + $0x18] sm:$0xf]
        %v1584 = vld [vmem:[%s3 + $0x1c] sm:$0xf]
        %v1585 = vld [vmem:[%s3 + $0x20] sm:$0xf]
        %v1586 = vld [vmem:[%s3 + $0x24] sm:$0xf]
        %v1587 = vld [vmem:[%s3 + $0x28] sm:$0xf]
        %v1588 = vld [vmem:[%s3 + $0x2c] sm:$0xf]
        %v1589 = vld [vmem:[%s3 + $0x30] sm:$0xf]
        %v1590 = vld [vmem:[%s3 + $0x34] sm:$0xf]
        %v1591 = vld [vmem:[%s3 + $0x38] sm:$0xf]
        %v1592 = vld [vmem:[%s3 + $0x3c] sm:$0xf]
        %v1593 = vld [vmem:[%s3 + $0x40] sm:$0xf]
        %v1594 = vld [vmem:[%s3 + $0x44] sm:$0xf]
        %v1595 = vld [vmem:[%s3 + $0x48] sm:$0xf]
        %v1596 = vld [vmem:[%s3 + $0x4c] sm:$0xf]
        %v1597 = vld [vmem:[%s3 + $0x50] sm:$0xf]
        %v1598 = vld [vmem:[%s3 + $0x54] sm:$0xf]
        %v1599 = vld [vmem:[%s3 + $0x58] sm:$0xf]
        %v1600 = vld [vmem:[%s3 + $0x5c] sm:$0xf]
        %v1601 = vld [vmem:[%s3 + $0x60] sm:$0xf]
        %v1602 = vld [vmem:[%s3 + $0x64] sm:$0xf]
        %v1603 = vld [vmem:[%s3 + $0x68] sm:$0xf]
        %v1604 = vld [vmem:[%s3 + $0x6c] sm:$0xf]
        %v1605 = vld [vmem:[%s3 + $0x70] sm:$0xf]
        %v1606 = vld [vmem:[%s3 + $0x74] sm:$0xf]
        %v1607 = vld [vmem:[%s3 + $0x78] sm:$0xf]
        %v1608 = vld [vmem:[%s3 + $0x7c] sm:$0xf]
        %v1609 = vld [vmem:[%s4] sm:$0x1]
        %v1611 = vlaneseq
        %v1612 = vshrl.u32 %v1611, 7
        %v1613 = vsub.s32 0, %v1612
        %v1614 = vrot.slane %v1609, %v1613
        %v1648 = vunpack.c.l.b16 %v1577
        %v1649 = vunpack.c.l.b16 %v1578
        %v1650 = vunpack.c.l.b16 %v1579
        %v1651 = vunpack.c.l.b16 %v1580
        %v1652 = vunpack.c.l.b16 %v1581
        %v1653 = vunpack.c.l.b16 %v1582
        %v1654 = vunpack.c.l.b16 %v1583
        %v1655 = vunpack.c.l.b16 %v1584
        %v1656 = vunpack.c.l.b16 %v1585
        %v1657 = vunpack.c.l.b16 %v1586
        %v1658 = vunpack.c.l.b16 %v1587
        %v1659 = vunpack.c.l.b16 %v1588
        %v1660 = vunpack.c.l.b16 %v1589
        %v1661 = vunpack.c.l.b16 %v1590
        %v1662 = vunpack.c.l.b16 %v1591
        %v1663 = vunpack.c.l.b16 %v1592
        %v1664 = vunpack.c.l.b16 %v1593
        %v1665 = vunpack.c.l.b16 %v1594
        %v1666 = vunpack.c.l.b16 %v1595
        %v1667 = vunpack.c.l.b16 %v1596
        %v1668 = vunpack.c.l.b16 %v1597
        %v1669 = vunpack.c.l.b16 %v1598
        %v1670 = vunpack.c.l.b16 %v1599
        %v1671 = vunpack.c.l.b16 %v1600
        %v1672 = vunpack.c.l.b16 %v1601
        %v1673 = vunpack.c.l.b16 %v1602
        %v1674 = vunpack.c.l.b16 %v1603
        %v1675 = vunpack.c.l.b16 %v1604
        %v1676 = vunpack.c.l.b16 %v1605
        %v1677 = vunpack.c.l.b16 %v1606
        %v1678 = vunpack.c.l.b16 %v1607
        %v1679 = vunpack.c.l.b16 %v1608
        %v1680 = vpack.c.b16 %v1649, %v1648
        %v1681 = vpack.c.b16 %v1651, %v1650
        %v1682 = vpack.c.b16 %v1653, %v1652
        %v1683 = vpack.c.b16 %v1655, %v1654
        %v1684 = vpack.c.b16 %v1657, %v1656
        %v1685 = vpack.c.b16 %v1659, %v1658
        %v1686 = vpack.c.b16 %v1661, %v1660
        %v1687 = vpack.c.b16 %v1663, %v1662
        %v1688 = vpack.c.b16 %v1665, %v1664
        %v1689 = vpack.c.b16 %v1667, %v1666
        %v1690 = vpack.c.b16 %v1669, %v1668
        %v1691 = vpack.c.b16 %v1671, %v1670
        %v1692 = vpack.c.b16 %v1673, %v1672
        %v1693 = vpack.c.b16 %v1675, %v1674
        %v1694 = vpack.c.b16 %v1677, %v1676
        %v1695 = vpack.c.b16 %v1679, %v1678
        %1712 = vmatprep.subr.bf16.mxu0 0
        %1713 = vmatpush1.bf16.msra.mxu0 %v1680
        %1714 = vmatprep.subr.bf16.mxu0 0
        %1715 = vmatpush1.bf16.msra.mxu0 %v1681
        %1716 = vmatprep.subr.bf16.mxu0 0
        %1717 = vmatpush1.bf16.msra.mxu0 %v1682
        %1718 = vmatprep.subr.bf16.mxu0 0
        %1719 = vmatpush1.bf16.msra.mxu0 %v1683
        %1720 = vmatprep.subr.bf16.mxu0 0
        %1721 = vmatpush1.bf16.msra.mxu0 %v1684
        %1722 = vmatprep.subr.bf16.mxu0 0
        %1723 = vmatpush1.bf16.msra.mxu0 %v1685
        %1724 = vmatprep.subr.bf16.mxu0 0
        %1725 = vmatpush1.bf16.msra.mxu0 %v1686
        %1726 = vmatprep.subr.bf16.mxu0 0
        %1727 = vmatpush1.bf16.msra.mxu0 %v1687
        %1728 = vmatprep.subr.bf16.mxu0 0
        %1729 = vmatpush1.bf16.msra.mxu0 %v1688
        %1730 = vmatprep.subr.bf16.mxu0 0
        %1731 = vmatpush1.bf16.msra.mxu0 %v1689
        %1732 = vmatprep.subr.bf16.mxu0 0
        %1733 = vmatpush1.bf16.msra.mxu0 %v1690
        %1734 = vmatprep.subr.bf16.mxu0 0
        %1735 = vmatpush1.bf16.msra.mxu0 %v1691
        %1736 = vmatprep.subr.bf16.mxu0 0
        %1737 = vmatpush1.bf16.msra.mxu0 %v1692
        %1738 = vmatprep.subr.bf16.mxu0 0
        %1739 = vmatpush1.bf16.msra.mxu0 %v1693
        %1740 = vmatprep.subr.bf16.mxu0 0
        %1741 = vmatpush1.bf16.msra.mxu0 %v1694
        %1742 = vmatprep.subr.bf16.mxu0 0
        %1743 = vmatpush1.bf16.msra.mxu0 %v1695
        %1744 = vmatprep.mubr.bf16.mxu0 %v1562
        %1745 = vmatmul.mubr.bf16.gmra.mrb[0].mxu0 %v1561
        %v1746 = vpop.f32.mrb[0].mxu0
        %v1747 = vadd.f32 %v1614, %v1746
        %v1748 = vpop.f32.mrb[0].mxu0
        %v1749 = vpop.f32.mrb[0].mxu0
        %v1750 = vadd.f32 %v1614, %v1749
        %v1751 = vpop.f32.mrb[0].mxu0
        %1752 = vmatprep.mubr.bf16.mxu0 %v1564
        %1753 = vmatmul.mubr.bf16.gmra.mrb[0].mxu0 %v1563
        %v1754 = vpop.f32.mrb[0].mxu0
        %v1755 = vadd.f32 %v1614, %v1754
        %v1756 = vpop.f32.mrb[0].mxu0
        %v1757 = vpop.f32.mrb[0].mxu0
        %v1758 = vadd.f32 %v1614, %v1757
        %v1759 = vpop.f32.mrb[0].mxu0
        %1760 = vmatprep.mubr.bf16.mxu0 %v1566
        %1761 = vmatmul.mubr.bf16.gmra.mrb[0].mxu0 %v1565
        %v1762 = vpop.f32.mrb[0].mxu0
        %v1763 = vadd.f32 %v1614, %v1762
        %v1764 = vpop.f32.mrb[0].mxu0
        %v1765 = vpop.f32.mrb[0].mxu0
        %v1766 = vadd.f32 %v1614, %v1765
        %v1767 = vpop.f32.mrb[0].mxu0
        %1768 = vmatprep.mubr.bf16.mxu0 %v1568
        %1769 = vmatmul.mubr.bf16.gmra.mrb[0].mxu0 %v1567
        %v1770 = vpop.f32.mrb[0].mxu0
        %v1771 = vadd.f32 %v1614, %v1770
        %v1772 = vpop.f32.mrb[0].mxu0
        %v1773 = vpop.f32.mrb[0].mxu0
        %v1774 = vadd.f32 %v1614, %v1773
        %v1775 = vpop.f32.mrb[0].mxu0
        %1776 = vmatprep.mubr.bf16.mxu0 %v1570
        %1777 = vmatmul.mubr.bf16.gmra.mrb[0].mxu0 %v1569
        %v1778 = vpop.f32.mrb[0].mxu0
        %v1779 = vadd.f32 %v1614, %v1778
        %v1780 = vpop.f32.mrb[0].mxu0
        %v1781 = vpop.f32.mrb[0].mxu0
        %v1782 = vadd.f32 %v1614, %v1781
        %v1783 = vpop.f32.mrb[0].mxu0
        %1784 = vmatprep.mubr.bf16.mxu0 %v1572
        %1785 = vmatmul.mubr.bf16.gmra.mrb[0].mxu0 %v1571
        %v1786 = vpop.f32.mrb[0].mxu0
        %v1787 = vadd.f32 %v1614, %v1786
        %v1788 = vpop.f32.mrb[0].mxu0
        %v1789 = vpop.f32.mrb[0].mxu0
        %v1790 = vadd.f32 %v1614, %v1789
        %v1791 = vpop.f32.mrb[0].mxu0
        %1792 = vmatprep.mubr.bf16.mxu0 %v1574
        %1793 = vmatmul.mubr.bf16.gmra.mrb[0].mxu0 %v1573
        %v1794 = vpop.f32.mrb[0].mxu0
        %v1795 = vadd.f32 %v1614, %v1794
        %v1796 = vpop.f32.mrb[0].mxu0
        %v1797 = vpop.f32.mrb[0].mxu0
        %v1798 = vadd.f32 %v1614, %v1797
        %v1799 = vpop.f32.mrb[0].mxu0
        %1800 = vmatprep.mubr.bf16.mxu0 %v1576
        %1801 = vmatmul.mubr.bf16.gmra.mrb[0].mxu0 %v1575
        %v1802 = vpop.f32.mrb[0].mxu0
        %v1803 = vadd.f32 %v1614, %v1802
        %v1804 = vpop.f32.mrb[0].mxu0
        %v1805 = vpop.f32.mrb[0].mxu0
        %v1806 = vadd.f32 %v1614, %v1805
        %v1807 = vpop.f32.mrb[0].mxu0
        %1808 = vdwg.mxu0
        %v1809 = vmax.f32 %v1747, 0.0
        %v1810 = vmax.f32 %v1750, 0.0
        %v1811 = vmax.f32 %v1755, 0.0
        %v1812 = vmax.f32 %v1758, 0.0
        %v1813 = vmax.f32 %v1763, 0.0
        %v1814 = vmax.f32 %v1766, 0.0
        %v1815 = vmax.f32 %v1771, 0.0
        %v1816 = vmax.f32 %v1774, 0.0
        %v1817 = vmax.f32 %v1779, 0.0
        %v1818 = vmax.f32 %v1782, 0.0
        %v1819 = vmax.f32 %v1787, 0.0
        %v1820 = vmax.f32 %v1790, 0.0
        %v1821 = vmax.f32 %v1795, 0.0
        %v1822 = vmax.f32 %v1798, 0.0
        %v1823 = vmax.f32 %v1803, 0.0
        %v1824 = vmax.f32 %v1806, 0.0
        %v1825 = vpack.c.bf16 %v1810, %v1809
        %v1826 = vpack.c.bf16 %v1812, %v1811
        %v1827 = vpack.c.bf16 %v1814, %v1813
        %v1828 = vpack.c.bf16 %v1816, %v1815
        %v1829 = vpack.c.bf16 %v1818, %v1817
        %v1830 = vpack.c.bf16 %v1820, %v1819
        %v1831 = vpack.c.bf16 %v1822, %v1821
        %v1832 = vpack.c.bf16 %v1824, %v1823
        %v1833 = vld [vmem:[%s5] sm:$0xf]
        %v1834 = vld [vmem:[%s5 + $0x4] sm:$0xf]
        %v1835 = vld [vmem:[%s5 + $0x8] sm:$0xf]
        %v1836 = vld [vmem:[%s5 + $0xc] sm:$0xf]
        %v1837 = vld [vmem:[%s5 + $0x10] sm:$0xf]
        %v1838 = vld [vmem:[%s5 + $0x14] sm:$0xf]
        %v1839 = vld [vmem:[%s5 + $0x18] sm:$0xf]
        %v1840 = vld [vmem:[%s5 + $0x1c] sm:$0xf]
        %v1841 = vld [vmem:[%s5 + $0x20] sm:$0xf]
        %v1842 = vld [vmem:[%s5 + $0x24] sm:$0xf]
        %v1843 = vld [vmem:[%s5 + $0x28] sm:$0xf]
        %v1844 = vld [vmem:[%s5 + $0x2c] sm:$0xf]
        %v1845 = vld [vmem:[%s5 + $0x30] sm:$0xf]
        %v1846 = vld [vmem:[%s5 + $0x34] sm:$0xf]
        %v1847 = vld [vmem:[%s5 + $0x38] sm:$0xf]
        %v1848 = vld [vmem:[%s5 + $0x3c] sm:$0xf]
        %v1849 = vld [vmem:[%s6] sm:$0x1]
        %v1851 = vlaneseq
        %v1852 = vshrl.u32 %v1851, 7
        %v1853 = vsub.s32 0, %v1852
        %v1854 = vrot.slane %v1849, %v1853
        %v1872 = vunpack.c.l.b16 %v1833
        %v1873 = vunpack.c.l.b16 %v1834
        %v1874 = vunpack.c.l.b16 %v1835
        %v1875 = vunpack.c.l.b16 %v1836
        %v1876 = vunpack.c.l.b16 %v1837
        %v1877 = vunpack.c.l.b16 %v1838
        %v1878 = vunpack.c.l.b16 %v1839
        %v1879 = vunpack.c.l.b16 %v1840
        %v1880 = vunpack.c.l.b16 %v1841
        %v1881 = vunpack.c.l.b16 %v1842
        %v1882 = vunpack.c.l.b16 %v1843
        %v1883 = vunpack.c.l.b16 %v1844
        %v1884 = vunpack.c.l.b16 %v1845
        %v1885 = vunpack.c.l.b16 %v1846
        %v1886 = vunpack.c.l.b16 %v1847
        %v1887 = vunpack.c.l.b16 %v1848
        %v1888 = vpack.c.b16 %v1873, %v1872
        %v1889 = vpack.c.b16 %v1875, %v1874
        %v1890 = vpack.c.b16 %v1877, %v1876
        %v1891 = vpack.c.b16 %v1879, %v1878
        %v1892 = vpack.c.b16 %v1881, %v1880
        %v1893 = vpack.c.b16 %v1883, %v1882
        %v1894 = vpack.c.b16 %v1885, %v1884
        %v1895 = vpack.c.b16 %v1887, %v1886
        %1904 = vmatprep.subr.bf16.mxu0 0
        %1905 = vmatpush1.bf16.msra.mxu0 %v1888
        %1906 = vmatprep.subr.bf16.mxu0 0
        %1907 = vmatpush1.bf16.msra.mxu0 %v1889
        %1908 = vmatprep.subr.bf16.mxu0 0
        %1909 = vmatpush1.bf16.msra.mxu0 %v1890
        %1910 = vmatprep.subr.bf16.mxu0 0
        %1911 = vmatpush1.bf16.msra.mxu0 %v1891
        %1912 = vmatprep.subr.bf16.mxu0 0
        %1913 = vmatpush1.bf16.msra.mxu0 %v1892
        %1914 = vmatprep.subr.bf16.mxu0 0
        %1915 = vmatpush1.bf16.msra.mxu0 %v1893
        %1916 = vmatprep.subr.bf16.mxu0 0
        %1917 = vmatpush1.bf16.msra.mxu0 %v1894
        %1918 = vmatprep.subr.bf16.mxu0 0
        %1919 = vmatpush1.bf16.msra.mxu0 %v1895
        %1920 = vmatprep.subr.bf16.mxu0 0
        %1921 = vmatpush1.bf16.msra.mxu0 0
        %1922 = vmatprep.subr.bf16.mxu0 0
        %1923 = vmatpush1.bf16.msra.mxu0 0
        %1924 = vmatprep.subr.bf16.mxu0 0
        %1925 = vmatpush1.bf16.msra.mxu0 0
        %1926 = vmatprep.subr.bf16.mxu0 0
        %1927 = vmatpush1.bf16.msra.mxu0 0
        %1928 = vmatprep.subr.bf16.mxu0 0
        %1929 = vmatpush1.bf16.msra.mxu0 0
        %1930 = vmatprep.subr.bf16.mxu0 0
        %1931 = vmatpush1.bf16.msra.mxu0 0
        %1932 = vmatprep.subr.bf16.mxu0 0
        %1933 = vmatpush1.bf16.msra.mxu0 0
        %1934 = vmatprep.subr.bf16.mxu0 0
        %1935 = vmatpush1.bf16.msra.mxu0 0
        %1936 = vmatprep.mubr.bf16.mxu0 0
        %1937 = vmatmul.mubr.bf16.gmra.mrb[0].mxu0 %v1825
        %v1938 = vpop.f32.mrb[0].mxu0
        %v1939 = vadd.f32 %v1854, %v1938
        %v1940 = vpop.f32.mrb[0].mxu0
        %v1941 = vpop.f32.mrb[0].mxu0
        %v1942 = vadd.f32 %v1854, %v1941
        %v1943 = vpop.f32.mrb[0].mxu0
        %1944 = vmatprep.mubr.bf16.mxu0 0
        %1945 = vmatmul.mubr.bf16.gmra.mrb[0].mxu0 %v1826
        %v1946 = vpop.f32.mrb[0].mxu0
        %v1947 = vadd.f32 %v1854, %v1946
        %v1948 = vpop.f32.mrb[0].mxu0
        %v1949 = vpop.f32.mrb[0].mxu0
        %v1950 = vadd.f32 %v1854, %v1949
        %v1951 = vpop.f32.mrb[0].mxu0
        %1952 = vmatprep.mubr.bf16.mxu0 0
        %1953 = vmatmul.mubr.bf16.gmra.mrb[0].mxu0 %v1827
        %v1954 = vpop.f32.mrb[0].mxu0
        %v1955 = vadd.f32 %v1854, %v1954
        %v1956 = vpop.f32.mrb[0].mxu0
        %v1957 = vpop.f32.mrb[0].mxu0
        %v1958 = vadd.f32 %v1854, %v1957
        %v1959 = vpop.f32.mrb[0].mxu0
        %1960 = vmatprep.mubr.bf16.mxu0 0
        %1961 = vmatmul.mubr.bf16.gmra.mrb[0].mxu0 %v1828
        %v1962 = vpop.f32.mrb[0].mxu0
        %v1963 = vadd.f32 %v1854, %v1962
        %v1964 = vpop.f32.mrb[0].mxu0
        %v1965 = vpop.f32.mrb[0].mxu0
        %v1966 = vadd.f32 %v1854, %v1965
        %v1967 = vpop.f32.mrb[0].mxu0
        %1968 = vmatprep.mubr.bf16.mxu0 0
        %1969 = vmatmul.mubr.bf16.gmra.mrb[0].mxu0 %v1829
        %v1970 = vpop.f32.mrb[0].mxu0
        %v1971 = vadd.f32 %v1854, %v1970
        %v1972 = vpop.f32.mrb[0].mxu0
        %v1973 = vpop.f32.mrb[0].mxu0
        %v1974 = vadd.f32 %v1854, %v1973
        %v1975 = vpop.f32.mrb[0].mxu0
        %1976 = vmatprep.mubr.bf16.mxu0 0
        %1977 = vmatmul.mubr.bf16.gmra.mrb[0].mxu0 %v1830
        %v1978 = vpop.f32.mrb[0].mxu0
        %v1979 = vadd.f32 %v1854, %v1978
        %v1980 = vpop.f32.mrb[0].mxu0
        %v1981 = vpop.f32.mrb[0].mxu0
        %v1982 = vadd.f32 %v1854, %v1981
        %v1983 = vpop.f32.mrb[0].mxu0
        %1984 = vmatprep.mubr.bf16.mxu0 0
        %1985 = vmatmul.mubr.bf16.gmra.mrb[0].mxu0 %v1831
        %v1986 = vpop.f32.mrb[0].mxu0
        %v1987 = vadd.f32 %v1854, %v1986
        %v1988 = vpop.f32.mrb[0].mxu0
        %v1989 = vpop.f32.mrb[0].mxu0
        %v1990 = vadd.f32 %v1854, %v1989
        %v1991 = vpop.f32.mrb[0].mxu0
        %1992 = vmatprep.mubr.bf16.mxu0 0
        %1993 = vmatmul.mubr.bf16.gmra.mrb[0].mxu0 %v1832
        %v1994 = vpop.f32.mrb[0].mxu0
        %v1995 = vadd.f32 %v1854, %v1994
        %v1996 = vpop.f32.mrb[0].mxu0
        %v1997 = vpop.f32.mrb[0].mxu0
        %v1998 = vadd.f32 %v1854, %v1997
        %v1999 = vpop.f32.mrb[0].mxu0
        %2000 = vdwg.mxu0
        %2001 = vmax.xlane.f32.xlu0 %v1939
        %v2002 = vpop.xlane.xlu0 %2001
        %2003 = vmax.xlane.f32.xlu0 %v1942
        %v2004 = vpop.xlane.xlu0 %2003
        %2005 = vmax.xlane.f32.xlu0 %v1947
        %v2006 = vpop.xlane.xlu0 %2005
        %2007 = vmax.xlane.f32.xlu0 %v1950
        %v2008 = vpop.xlane.xlu0 %2007
        %2009 = vmax.xlane.f32.xlu0 %v1955
        %v2010 = vpop.xlane.xlu0 %2009
        %2011 = vmax.xlane.f32.xlu0 %v1958
        %v2012 = vpop.xlane.xlu0 %2011
        %2013 = vmax.xlane.f32.xlu0 %v1963
        %v2014 = vpop.xlane.xlu0 %2013
        %2015 = vmax.xlane.f32.xlu0 %v1966
        %v2016 = vpop.xlane.xlu0 %2015
        %2017 = vmax.xlane.f32.xlu0 %v1971
        %v2018 = vpop.xlane.xlu0 %2017
        %2019 = vmax.xlane.f32.xlu0 %v1974
        %v2020 = vpop.xlane.xlu0 %2019
        %2021 = vmax.xlane.f32.xlu0 %v1979
        %v2022 = vpop.xlane.xlu0 %2021
        %2023 = vmax.xlane.f32.xlu0 %v1982
        %v2024 = vpop.xlane.xlu0 %2023
        %2025 = vmax.xlane.f32.xlu0 %v1987
        %v2026 = vpop.xlane.xlu0 %2025
        %2027 = vmax.xlane.f32.xlu0 %v1990
        %v2028 = vpop.xlane.xlu0 %2027
        %2029 = vmax.xlane.f32.xlu0 %v1995
        %v2030 = vpop.xlane.xlu0 %2029
        %2031 = vmax.xlane.f32.xlu0 %v1998
        %v2032 = vpop.xlane.xlu0 %2031
        %v2033 = vsub.f32 %v1939, %v2002
        %v2034 = vsub.f32 %v1942, %v2004
        %v2035 = vsub.f32 %v1947, %v2006
        %v2036 = vsub.f32 %v1950, %v2008
        %v2037 = vsub.f32 %v1955, %v2010
        %v2038 = vsub.f32 %v1958, %v2012
        %v2039 = vsub.f32 %v1963, %v2014
        %v2040 = vsub.f32 %v1966, %v2016
        %v2041 = vsub.f32 %v1971, %v2018
        %v2042 = vsub.f32 %v1974, %v2020
        %v2043 = vsub.f32 %v1979, %v2022
        %v2044 = vsub.f32 %v1982, %v2024
        %v2045 = vsub.f32 %v1987, %v2026
        %v2046 = vsub.f32 %v1990, %v2028
        %v2047 = vsub.f32 %v1995, %v2030
        %v2048 = vsub.f32 %v1998, %v2032
        %v2049 = vmul.f32 %v2033, 1.442695
        %v2050 = vpow.pop %v2049
        %v2051 = vmul.f32 %v2034, 1.442695
        %v2052 = vpow.pop %v2051
        %v2053 = vmul.f32 %v2035, 1.442695
        %v2054 = vpow.pop %v2053
        %v2055 = vmul.f32 %v2036, 1.442695
        %v2056 = vpow.pop %v2055
        %v2057 = vmul.f32 %v2037, 1.442695
        %v2058 = vpow.pop %v2057
        %v2059 = vmul.f32 %v2038, 1.442695
        %v2060 = vpow.pop %v2059
        %v2061 = vmul.f32 %v2039, 1.442695
        %v2062 = vpow.pop %v2061
        %v2063 = vmul.f32 %v2040, 1.442695
        %v2064 = vpow.pop %v2063
        %v2065 = vmul.f32 %v2041, 1.442695
        %v2066 = vpow.pop %v2065
        %v2067 = vmul.f32 %v2042, 1.442695
        %v2068 = vpow.pop %v2067
        %v2069 = vmul.f32 %v2043, 1.442695
        %v2070 = vpow.pop %v2069
        %v2071 = vmul.f32 %v2044, 1.442695
        %v2072 = vpow.pop %v2071
        %v2073 = vmul.f32 %v2045, 1.442695
        %v2074 = vpow.pop %v2073
        %v2075 = vmul.f32 %v2046, 1.442695
        %v2076 = vpow.pop %v2075
        %v2077 = vmul.f32 %v2047, 1.442695
        %v2078 = vpow.pop %v2077
        %v2079 = vmul.f32 %v2048, 1.442695
        %v2080 = vpow.pop %v2079
        %2081 = vadd.xlane.f32.xlu0 %v2050
        %v2082 = vpop.xlane.xlu0 %2081
        %2083 = vadd.xlane.f32.xlu0 %v2052
        %v2084 = vpop.xlane.xlu0 %2083
        %2085 = vadd.xlane.f32.xlu0 %v2054
        %v2086 = vpop.xlane.xlu0 %2085
        %2087 = vadd.xlane.f32.xlu0 %v2056
        %v2088 = vpop.xlane.xlu0 %2087
        %2089 = vadd.xlane.f32.xlu0 %v2058
        %v2090 = vpop.xlane.xlu0 %2089
        %2091 = vadd.xlane.f32.xlu0 %v2060
        %v2092 = vpop.xlane.xlu0 %2091
        %2093 = vadd.xlane.f32.xlu0 %v2062
        %v2094 = vpop.xlane.xlu0 %2093
        %2095 = vadd.xlane.f32.xlu0 %v2064
        %v2096 = vpop.xlane.xlu0 %2095
        %2097 = vadd.xlane.f32.xlu0 %v2066
        %v2098 = vpop.xlane.xlu0 %2097
        %2099 = vadd.xlane.f32.xlu0 %v2068
        %v2100 = vpop.xlane.xlu0 %2099
        %2101 = vadd.xlane.f32.xlu0 %v2070
        %v2102 = vpop.xlane.xlu0 %2101
        %2103 = vadd.xlane.f32.xlu0 %v2072
        %v2104 = vpop.xlane.xlu0 %2103
        %2105 = vadd.xlane.f32.xlu0 %v2074
        %v2106 = vpop.xlane.xlu0 %2105
        %2107 = vadd.xlane.f32.xlu0 %v2076
        %v2108 = vpop.xlane.xlu0 %2107
        %2109 = vadd.xlane.f32.xlu0 %v2078
        %v2110 = vpop.xlane.xlu0 %2109
        %2111 = vadd.xlane.f32.xlu0 %v2080
        %v2112 = vpop.xlane.xlu0 %2111
        %v2113 = vrcp.pop %v2082
        %v2114 = vrcp.pop %v2084
        %v2115 = vrcp.pop %v2086
        %v2116 = vrcp.pop %v2088
        %v2117 = vrcp.pop %v2090
        %v2118 = vrcp.pop %v2092
        %v2119 = vrcp.pop %v2094
        %v2120 = vrcp.pop %v2096
        %v2121 = vrcp.pop %v2098
        %v2122 = vrcp.pop %v2100
        %v2123 = vrcp.pop %v2102
        %v2124 = vrcp.pop %v2104
        %v2125 = vrcp.pop %v2106
        %v2126 = vrcp.pop %v2108
        %v2127 = vrcp.pop %v2110
        %v2128 = vrcp.pop %v2112
        %v2129 = vmul.f32 %v2050, %v2113
        %v2130 = vmul.f32 %v2052, %v2114
        %v2131 = vmul.f32 %v2054, %v2115
        %v2132 = vmul.f32 %v2056, %v2116
        %v2133 = vmul.f32 %v2058, %v2117
        %v2134 = vmul.f32 %v2060, %v2118
        %v2135 = vmul.f32 %v2062, %v2119
        %v2136 = vmul.f32 %v2064, %v2120
        %v2137 = vmul.f32 %v2066, %v2121
        %v2138 = vmul.f32 %v2068, %v2122
        %v2139 = vmul.f32 %v2070, %v2123
        %v2140 = vmul.f32 %v2072, %v2124
        %v2141 = vmul.f32 %v2074, %v2125
        %v2142 = vmul.f32 %v2076, %v2126
        %v2143 = vmul.f32 %v2078, %v2127
        %v2144 = vmul.f32 %v2080, %v2128
        %v2145 = vpack.c.bf16 %v2130, %v2129
        %v2146 = vpack.c.bf16 %v2132, %v2131
        %v2147 = vpack.c.bf16 %v2134, %v2133
        %v2148 = vpack.c.bf16 %v2136, %v2135
        %v2149 = vpack.c.bf16 %v2138, %v2137
        %v2150 = vpack.c.bf16 %v2140, %v2139
        %v2151 = vpack.c.bf16 %v2142, %v2141
        %v2152 = vpack.c.bf16 %v2144, %v2143
        %v2161 = vunpack.c.l.b16 %v2145
        %v2162 = vunpack.c.h.b16 %v2145
        %v2163 = vunpack.c.l.b16 %v2146
        %v2164 = vunpack.c.h.b16 %v2146
        %v2165 = vunpack.c.l.b16 %v2147
        %v2166 = vunpack.c.h.b16 %v2147
        %v2167 = vunpack.c.l.b16 %v2148
        %v2168 = vunpack.c.h.b16 %v2148
        %v2169 = vunpack.c.l.b16 %v2149
        %v2170 = vunpack.c.h.b16 %v2149
        %v2171 = vunpack.c.l.b16 %v2150
        %v2172 = vunpack.c.h.b16 %v2150
        %v2173 = vunpack.c.l.b16 %v2151
        %v2174 = vunpack.c.h.b16 %v2151
        %v2175 = vunpack.c.l.b16 %v2152
        %v2176 = vunpack.c.h.b16 %v2152
        %v2177 = vpack.c.b16 %v2161, %v2161
        %v2178 = vpack.c.b16 %v2162, %v2162
        %v2179 = vpack.c.b16 %v2163, %v2163
        %v2180 = vpack.c.b16 %v2164, %v2164
        %v2181 = vpack.c.b16 %v2165, %v2165
        %v2182 = vpack.c.b16 %v2166, %v2166
        %v2183 = vpack.c.b16 %v2167, %v2167
        %v2184 = vpack.c.b16 %v2168, %v2168
        %v2185 = vpack.c.b16 %v2169, %v2169
        %v2186 = vpack.c.b16 %v2170, %v2170
        %v2187 = vpack.c.b16 %v2171, %v2171
        %v2188 = vpack.c.b16 %v2172, %v2172
        %v2189 = vpack.c.b16 %v2173, %v2173
        %v2190 = vpack.c.b16 %v2174, %v2174
        %v2191 = vpack.c.b16 %v2175, %v2175
        %v2192 = vpack.c.b16 %v2176, %v2176
        %2209 = vst [vmem:[%s274] sm:$0xf] %v2177
        %2210 = vst [vmem:[%s274 + $0x4] sm:$0xf] %v2178
        %2211 = vst [vmem:[%s274 + $0x8] sm:$0xf] %v2179
        %2212 = vst [vmem:[%s274 + $0xc] sm:$0xf] %v2180
        %2213 = vst [vmem:[%s274 + $0x10] sm:$0xf] %v2181
        %2214 = vst [vmem:[%s274 + $0x14] sm:$0xf] %v2182
        %2215 = vst [vmem:[%s274 + $0x18] sm:$0xf] %v2183
        %2216 = vst [vmem:[%s274 + $0x1c] sm:$0xf] %v2184
        %2217 = vst [vmem:[%s274 + $0x20] sm:$0xf] %v2185
        %2218 = vst [vmem:[%s274 + $0x24] sm:$0xf] %v2186
        %2219 = vst [vmem:[%s274 + $0x28] sm:$0xf] %v2187
        %2220 = vst [vmem:[%s274 + $0x2c] sm:$0xf] %v2188
        %2221 = vst [vmem:[%s274 + $0x30] sm:$0xf] %v2189
        %2222 = vst [vmem:[%s274 + $0x34] sm:$0xf] %v2190
        %2223 = vst [vmem:[%s274 + $0x38] sm:$0xf] %v2191
        %2224 = vst [vmem:[%s274 + $0x3c] sm:$0xf] %v2192
        %s2225 = sand.u32 %s181, 1
        %s2226 = scalar_lea.sflag [#allocation3], %s2225
        %s2227 = sand.u32 %s181, 1
        %s2228 = smul.addr %s2227, 64
        %s2229 = scalar_lea.vmem [#allocation2], %s2228
        // Predicated region
        $region49: #{tpu_custom_call.1} parent=47 // pred_check
          %p2230 = pneg %p191
        $region50: #{tpu_custom_call.1} parent=47 // pred_check_branch
          %2232 = sbr.rel (%p2230) target = $region52
        $region51: #{tpu_custom_call.1} parent=47 // pred_region
          %s2233 = smul.u32 16, %s21
          %s2235 = ssub.s32 1024, 1024
          %2236 = vsyncadd %s2226, %s2235
          %s2237 = smul.addr %s2233, 64
          %s2238 = scalar_lea.hbm %s7, %s2237
          %s2239 = sshll.u32 %s2229, 4
          %s2240 = int_to_ptr.vmem [resolvable:$true] %s2239
          %2245 = dma.vmem_to_hbm [thread:$0]  %s2240, 1024, %s2238, %s2226, 64, 64, 4
        $region52: #{tpu_custom_call.1} parent=47 // pred_fallthru
          _
      $region48: #{tpu_custom_call.1} parent=5 // pred_fallthru
        _
      %p2246 = scmp.le.s32.totalorder 2, %s16
      // Predicated region
      $region53: #{tpu_custom_call.1} parent=5 // pred_check
        %p2247 = pneg %p2246
      $region54: #{tpu_custom_call.1} parent=5 // pred_check_branch
        %2249 = sbr.rel (%p2247) target = $region56
      $region55: #{tpu_custom_call.1} parent=5 // pred_region
        %s2250 = ssub.s32 %s16, 2
        // Predicated region
        $region57: #{tpu_custom_call.1} parent=55 // pred_check
          %p2251 = pneg %p197
        $region58: #{tpu_custom_call.1} parent=55 // pred_check_branch
          %2253 = sbr.rel (%p2251) target = $region60
        $region59: #{tpu_custom_call.1} parent=55 // pred_region
          %s2254 = sand.u32 %s182, 1
          %s2255 = scalar_lea.sflag [#allocation3], %s2254
          %s2256 = sand.u32 %s182, 1
          %s2257 = smul.addr %s2256, 64
          %s2258 = scalar_lea.vmem [#allocation2], %s2257
          %2259 = dma.done %s2255, 1024
        $region60: #{tpu_custom_call.1} parent=55 // pred_fallthru
          _
      $region56: #{tpu_custom_call.1} parent=5 // pred_fallthru
        _
    $region6: #{tpu_custom_call.1} parent=1 // loop_footer
      %s20 = sadd.s32 1, %s16
    $region7: #{tpu_custom_call.1} parent=1 // loop_footer_branch
      %15 = sbr.rel target = $region3
    $region8: #{tpu_custom_call.1} parent=1 // loop_exit
      _
    %2260 = vsyncpa [#allocation3], 1
    %s2261 = scalar_lea.sflag [#allocation3], 1
    %2262 = vsyncpa %s2261, 1

</llo_original>
